<compile_context>
chip_gen: v7x
topology: tpu7x:2x2x1
jax: 0.10.0
libtpu: 0.0.40
codegen_flags: <defaults>
</compile_context>

<pallas_src>
import jax
import jax.numpy as jnp
from jax.experimental import pallas as pl
from jax.experimental.pallas import tpu as pltpu


NUM_CHAMPIONS = 50
EMBEDDING_DIM = 32
NUM_PICKS = 10           # x[:, :10]
H1, H2, H_OUT = 128, 64, 1
DEFAULT_TILE_B = 1024    # ~7 MB live VMEM/tile; safe on v5e/v6e/v7x defaults


def _round_up(x, m):
    return ((x + m - 1) // m) * m


def _lol_kernel(ids_ref, s_ref, loc_ref, m_ref, b1_ref, w2_ref, b2_ref,
                w3_ref, b3_ref, out_ref):
    """Fused (embedding + Linear1 + ReLU) -> Linear2 -> ReLU -> Linear3 -> sigmoid.

    ids_ref : (TB, 10)    int32   -- champion ids for this batch tile
    s_ref   : (10, K)     f32     -- selector, S[t, t*C + c] = 1
    loc_ref : (1, K)      f32     -- per-lane local id c (padded lanes = -1)
    m_ref   : (K, 128)    f32     -- fused table (x) W1 blocks
    b1_ref  : (1, 128)    f32
    w2_ref  : (128, 64)   f32,  b2_ref: (1, 64)
    w3_ref  : (1, 64)     f32   (row form of the (64, 1) weight), b3_ref: (1, 1)
    out_ref : (1, TB)     f32   -- lane-dense output row
    """
    # Selector matmul on the MXU: lane t*C + c now holds ids[:, t] (exact in f32).
    ids_f = ids_ref[...].astype(jnp.float32)                       # (TB, 10)
    gathered = jnp.dot(ids_f, s_ref[...],
                       preferred_element_type=jnp.float32)         # (TB, K)
    # Single compare + cast builds the one-hot (exact float equality of ints).
    onehot = (gathered == loc_ref[...]).astype(jnp.float32)        # (TB, K)

    # Layer 1: embedding gather + Linear fused into one MXU matmul, bias added
    # post-matmul (cheaper than a bias lane in the one-hot).
    h1 = jnp.maximum(
        jnp.dot(onehot, m_ref[...], preferred_element_type=jnp.float32)
        + b1_ref[...], 0.0)                                        # (TB, 128)
    # Dropout(0.3) -> identity in eval mode.
    # Layer 2.
    h2 = jnp.maximum(
        jnp.dot(h1, w2_ref[...], preferred_element_type=jnp.float32)
        + b2_ref[...], 0.0)                                        # (TB, 64)
    # Layer 3, lane-dense: (1, 64) contracted with (TB, 64) -> (1, TB).
    logits = jax.lax.dot_general(
        w3_ref[...], h2, (((1,), (1,)), ((), ())),
        preferred_element_type=jnp.float32) + b3_ref[...]          # (1, TB)
    out_ref[...] = jax.nn.sigmoid(logits)


def init_params(key, num_champions=NUM_CHAMPIONS, embedding_dim=EMBEDDING_DIM):
    """Deterministic synthetic parameters (shapes from the module's __init__).

    Linear weights are stored TRANSPOSED vs. PyTorch: (in_features, out_features).
    """
    ks = jax.random.split(key, 7)
    in1 = NUM_PICKS * embedding_dim

    def lin(kw, kb, fan_in, fan_out):
        bound = 1.0 / jnp.sqrt(jnp.float32(fan_in))
        w = jax.random.uniform(kw, (fan_in, fan_out), jnp.float32, -bound, bound)
        b = jax.random.uniform(kb, (1, fan_out), jnp.float32, -bound, bound)
        return w, b

    table = jax.random.normal(ks[0], (num_champions, embedding_dim), jnp.float32)
    w1, b1 = lin(ks[1], ks[2], in1, H1)
    w2, b2 = lin(ks[3], ks[4], H1, H2)
    w3, b3 = lin(ks[5], ks[6], H2, H_OUT)
    return dict(table=table, w1=w1, b1=b1, w2=w2, b2=b2, w3=w3, b3=b3)


def prepare_params(params):
    """One-time parameter prep (hoisted out of the per-call forward path)."""
    table = params["table"].astype(jnp.float32)
    w1 = params["w1"].astype(jnp.float32)
    c, e = table.shape
    h1 = w1.shape[1]
    p = NUM_PICKS

    # M[t*C + c, :] = table[c] @ W1[t*E:(t+1)*E, :]
    m = jnp.einsum("ce,peh->pch", table, w1.reshape(p, e, h1)).reshape(p * c, h1)
    k_pad = _round_up(p * c, 128)                       # lane-align (500 -> 512)
    m_pad = jnp.zeros((k_pad, h1), jnp.float32).at[:p * c].set(m)

    # Selector S[t, t*C + c] = 1 (zero on padded lanes).
    rows = jnp.repeat(jnp.arange(p), c)
    cols = jnp.arange(p * c)
    sel = jnp.zeros((p, k_pad), jnp.float32).at[rows, cols].set(1.0)

    # Per-lane local champion id; padded lanes get -1 so they never match.
    lane = jnp.arange(k_pad)
    local = jnp.where(lane < p * c, (lane % c).astype(jnp.float32),
                      jnp.float32(-1.0)).reshape(1, k_pad)

    return dict(
        sel=sel, local=local, m=m_pad,
        b1=params["b1"].reshape(1, h1).astype(jnp.float32),
        w2=params["w2"].astype(jnp.float32),
        b2=params["b2"].reshape(1, -1).astype(jnp.float32),
        w3_row=params["w3"].reshape(1, -1).astype(jnp.float32),
        b3=params["b3"].reshape(1, 1).astype(jnp.float32),
    )


def lol_forward(x, prep, tile_b=DEFAULT_TILE_B):
    """x: (B, F) float32 with champion ids in the first 10 columns."""
    ids = x[:, :NUM_PICKS].astype(jnp.int32)            # glue: slice + cast
    b = ids.shape[0]
    k_pad, h1 = prep["m"].shape
    h2 = prep["w2"].shape[1]

    # Tile selection: multiples of 128 (lane-dense output block), capped at
    # tile_b, and sized so moderate batches give >= ~4 grid steps (megacore).
    tb = min(tile_b, max(128, _round_up(-(-b // 4), 128)))
    b_pad = _round_up(b, tb)
    if b_pad != b:
        ids = jnp.pad(ids, ((0, b_pad - b), (0, 0)))     # padded rows use id 0

    grid = (b_pad // tb,)
    flops = 2 * b_pad * (NUM_PICKS * k_pad + k_pad * h1 + h1 * h2 + h2)
    bytes_accessed = (b_pad * NUM_PICKS * 4 + b_pad * 4
                      + (NUM_PICKS * k_pad + k_pad + k_pad * h1
                         + h1 + h1 * h2 + h2 + h2 + 1) * 4)

    resident = lambda i: (0, 0)                          # weights stay put
    out = pl.pallas_call(
        _lol_kernel,
        out_shape=jax.ShapeDtypeStruct((1, b_pad), jnp.float32),
        grid_spec=pltpu.PrefetchScalarGridSpec(
            num_scalar_prefetch=0,
            grid=grid,
            in_specs=[
                pl.BlockSpec((tb, NUM_PICKS), lambda i: (i, 0)),   # ids: tiled
                pl.BlockSpec((NUM_PICKS, k_pad), resident),        # selector S
                pl.BlockSpec((1, k_pad), resident),                # local ids
                pl.BlockSpec((k_pad, h1), resident),               # fused M
                pl.BlockSpec((1, h1), resident),                   # b1
                pl.BlockSpec((h1, h2), resident),                  # w2
                pl.BlockSpec((1, h2), resident),                   # b2
                pl.BlockSpec((1, h2), resident),                   # w3 row
                pl.BlockSpec((1, 1), resident),                    # b3
            ],
            out_specs=pl.BlockSpec((1, tb), lambda i: (0, i)),     # lane-dense
        ),
        compiler_params=pltpu.CompilerParams(
            dimension_semantics=("parallel",),       # shards grid across TCs (v7x)
            vmem_limit_bytes=32 * 1024 * 1024,       # headroom for larger tile_b
        ),
        cost_estimate=pl.CostEstimate(
            flops=flops, transcendentals=b_pad, bytes_accessed=bytes_accessed),
    )(ids, prep["sel"], prep["local"], prep["m"], prep["b1"],
      prep["w2"], prep["b2"], prep["w3_row"], prep["b3"])

    return out[0, :b].reshape(b, 1)


def lol_forward_ref(x, params):
    """Pure-JAX reference (eval-mode forward of the PyTorch module)."""
    ids = x[:, :NUM_PICKS].astype(jnp.int32)
    b = ids.shape[0]
    embeds = jnp.take(params["table"], ids, axis=0).reshape(b, -1)
    h1 = jnp.maximum(embeds @ params["w1"] + params["b1"], 0.0)
    h2 = jnp.maximum(h1 @ params["w2"] + params["b2"], 0.0)
    return jax.nn.sigmoid(h2 @ params["w3"] + params["b3"])


if __name__ == "__main__":
    key = jax.random.PRNGKey(0)
    k_param, k_ids, k_extra = jax.random.split(key, 3)

    B, F = 8, 12   # first 10 columns are champion ids; the rest is ignored
    params = init_params(k_param)
    prep = prepare_params(params)          # one-time prep, reused across calls

    champ_ids = jax.random.randint(k_ids, (B, NUM_PICKS), 0, NUM_CHAMPIONS)
    extra = jax.random.normal(k_extra, (B, F - NUM_PICKS), jnp.float32)
    x = jnp.concatenate([champ_ids.astype(jnp.float32), extra], axis=1)

    out = jax.block_until_ready(lol_forward(x, prep))
    ref = jax.block_until_ready(lol_forward_ref(x, params))

    assert out.shape == (B, 1), out.shape
    assert jnp.allclose(out, ref, atol=1e-5, rtol=1e-5), (out, ref)
    print("KERNEL_OK")
</pallas_src>

<mosaic_0001>
module attributes {stable_mosaic.version = 11 : i64} {
  func.func @_lol_kernel(%arg0: i32, %arg1: memref<128x10xi32, #tpu.memory_space<vmem>>, %arg2: memref<10x512xf32, #tpu.memory_space<vmem>>, %arg3: memref<1x512xf32, #tpu.memory_space<vmem>>, %arg4: memref<512x128xf32, #tpu.memory_space<vmem>>, %arg5: memref<1x128xf32, #tpu.memory_space<vmem>>, %arg6: memref<128x64xf32, #tpu.memory_space<vmem>>, %arg7: memref<1x64xf32, #tpu.memory_space<vmem>>, %arg8: memref<1x64xf32, #tpu.memory_space<vmem>>, %arg9: memref<1x1xf32, #tpu.memory_space<vmem>>, %arg10: memref<1x128xf32, #tpu.memory_space<vmem>>) attributes {dimension_semantics = [#tpu.dimension_semantics<parallel>], iteration_bounds = array<i64: 1>, scalar_prefetch = 0 : i64, scratch_operands = 0 : i64, tpu.core_type = #tpu.core_type<tc>, window_params = [{transform_indices = @transform_0, window_bounds = array<i64: 128, 10>}, {pipeline_mode = #tpu.pipeline_mode<synchronous>, transform_indices = @transform_1, window_bounds = array<i64: 10, 512>}, {pipeline_mode = #tpu.pipeline_mode<synchronous>, transform_indices = @transform_2, window_bounds = array<i64: 1, 512>}, {pipeline_mode = #tpu.pipeline_mode<synchronous>, transform_indices = @transform_3, window_bounds = array<i64: 512, 128>}, {pipeline_mode = #tpu.pipeline_mode<synchronous>, transform_indices = @transform_4, window_bounds = array<i64: 1, 128>}, {pipeline_mode = #tpu.pipeline_mode<synchronous>, transform_indices = @transform_5, window_bounds = array<i64: 128, 64>}, {pipeline_mode = #tpu.pipeline_mode<synchronous>, transform_indices = @transform_6, window_bounds = array<i64: 1, 64>}, {pipeline_mode = #tpu.pipeline_mode<synchronous>, transform_indices = @transform_7, window_bounds = array<i64: 1, 64>}, {pipeline_mode = #tpu.pipeline_mode<synchronous>, transform_indices = @transform_8, window_bounds = array<i64: 1, 1>}, {transform_indices = @transform_9, window_bounds = array<i64: 1, 128>}]} {
    %c0 = arith.constant 0 : index
    %c0_0 = arith.constant 0 : index
    %0 = vector.load %arg1[%c0, %c0_0] : memref<128x10xi32, #tpu.memory_space<vmem>>, vector<128x10xi32>
    %1 = arith.sitofp %0 : vector<128x10xi32> to vector<128x10xf32>
    %c0_1 = arith.constant 0 : index
    %c0_2 = arith.constant 0 : index
    %2 = vector.load %arg2[%c0_1, %c0_2] : memref<10x512xf32, #tpu.memory_space<vmem>>, vector<10x512xf32>
    %cst = arith.constant dense<0.000000e+00> : vector<128x512xf32>
    %3 = tpu.matmul %1, %2, %cst {dimension_numbers = #tpu.dot_dimension_numbers<[1], [0], [0], [1], [0, 0, 1, 1], [], []>} : vector<128x10xf32>, vector<10x512xf32>, vector<128x512xf32> -> vector<128x512xf32>
    %c0_3 = arith.constant 0 : index
    %c0_4 = arith.constant 0 : index
    %4 = vector.load %arg3[%c0_3, %c0_4] : memref<1x512xf32, #tpu.memory_space<vmem>>, vector<1x512xf32>
    %5 = vector.broadcast %4 : vector<1x512xf32> to vector<128x512xf32>
    %6 = arith.cmpf oeq, %3, %5 : vector<128x512xf32>
    %7 = arith.extui %6 : vector<128x512xi1> to vector<128x512xi32>
    %8 = arith.sitofp %7 : vector<128x512xi32> to vector<128x512xf32>
    %c0_5 = arith.constant 0 : index
    %c0_6 = arith.constant 0 : index
    %9 = vector.load %arg4[%c0_5, %c0_6] : memref<512x128xf32, #tpu.memory_space<vmem>>, vector<512x128xf32>
    %cst_7 = arith.constant dense<0.000000e+00> : vector<128x128xf32>
    %10 = tpu.matmul %8, %9, %cst_7 {dimension_numbers = #tpu.dot_dimension_numbers<[1], [0], [0], [1], [0, 0, 1, 1], [], []>} : vector<128x512xf32>, vector<512x128xf32>, vector<128x128xf32> -> vector<128x128xf32>
    %c0_8 = arith.constant 0 : index
    %c0_9 = arith.constant 0 : index
    %11 = vector.load %arg5[%c0_8, %c0_9] : memref<1x128xf32, #tpu.memory_space<vmem>>, vector<1x128xf32>
    %12 = vector.broadcast %11 : vector<1x128xf32> to vector<128x128xf32>
    %13 = arith.addf %10, %12 : vector<128x128xf32>
    %cst_10 = arith.constant 0.000000e+00 : f32
    %14 = vector.broadcast %cst_10 : f32 to vector<128x128xf32>
    %15 = arith.maximumf %13, %14 : vector<128x128xf32>
    %c0_11 = arith.constant 0 : index
    %c0_12 = arith.constant 0 : index
    %16 = vector.load %arg6[%c0_11, %c0_12] : memref<128x64xf32, #tpu.memory_space<vmem>>, vector<128x64xf32>
    %cst_13 = arith.constant dense<0.000000e+00> : vector<128x64xf32>
    %17 = tpu.matmul %15, %16, %cst_13 {dimension_numbers = #tpu.dot_dimension_numbers<[1], [0], [0], [1], [0, 0, 1, 1], [], []>} : vector<128x128xf32>, vector<128x64xf32>, vector<128x64xf32> -> vector<128x64xf32>
    %c0_14 = arith.constant 0 : index
    %c0_15 = arith.constant 0 : index
    %18 = vector.load %arg7[%c0_14, %c0_15] : memref<1x64xf32, #tpu.memory_space<vmem>>, vector<1x64xf32>
    %19 = vector.broadcast %18 : vector<1x64xf32> to vector<128x64xf32>
    %20 = arith.addf %17, %19 : vector<128x64xf32>
    %cst_16 = arith.constant 0.000000e+00 : f32
    %21 = vector.broadcast %cst_16 : f32 to vector<128x64xf32>
    %22 = arith.maximumf %20, %21 : vector<128x64xf32>
    %c0_17 = arith.constant 0 : index
    %c0_18 = arith.constant 0 : index
    %23 = vector.load %arg8[%c0_17, %c0_18] : memref<1x64xf32, #tpu.memory_space<vmem>>, vector<1x64xf32>
    %cst_19 = arith.constant dense<0.000000e+00> : vector<1x128xf32>
    %24 = tpu.matmul %23, %22, %cst_19 {dimension_numbers = #tpu.dot_dimension_numbers<[1], [1], [0], [0], [0, 0, 1, 0], [], []>} : vector<1x64xf32>, vector<128x64xf32>, vector<1x128xf32> -> vector<1x128xf32>
    %c0_20 = arith.constant 0 : index
    %c0_21 = arith.constant 0 : index
    %25 = vector.load %arg9[%c0_20, %c0_21] : memref<1x1xf32, #tpu.memory_space<vmem>>, vector<1x1xf32>
    %26 = vector.broadcast %25 : vector<1x1xf32> to vector<1x128xf32>
    %27 = arith.addf %24, %26 : vector<1x128xf32>
    %28 = arith.negf %27 : vector<1x128xf32>
    %29 = math.exp %28 : vector<1x128xf32>
    %cst_22 = arith.constant 1.000000e+00 : f32
    %30 = vector.broadcast %cst_22 : f32 to vector<1x128xf32>
    %31 = arith.addf %30, %29 : vector<1x128xf32>
    %32 = arith.divf %30, %31 : vector<1x128xf32>
    %c0_23 = arith.constant 0 : index
    %c0_24 = arith.constant 0 : index
    %33 = vector.load %arg10[%c0_23, %c0_24] : memref<1x128xf32, #tpu.memory_space<vmem>>, vector<1x128xf32>
    tpu.vector_store %arg10[%c0_23, %c0_24], %32 {strides = array<i32>} : memref<1x128xf32, #tpu.memory_space<vmem>>, vector<1x128xf32>,
    return
  }
  func.func @transform_0(%arg0: i32) -> (i32, i32) {
    %c0_i32 = arith.constant 0 : i32
    %c0_i32_0 = arith.constant 0 : i32
    return %arg0, %c0_i32 : i32, i32
  }
  func.func @transform_1(%arg0: i32) -> (i32, i32) {
    %c0_i32 = arith.constant 0 : i32
    %c0_i32_0 = arith.constant 0 : i32
    %c0_i32_1 = arith.constant 0 : i32
    return %c0_i32, %c0_i32_0 : i32, i32
  }
  func.func @transform_2(%arg0: i32) -> (i32, i32) {
    %c0_i32 = arith.constant 0 : i32
    %c0_i32_0 = arith.constant 0 : i32
    %c0_i32_1 = arith.constant 0 : i32
    return %c0_i32, %c0_i32_0 : i32, i32
  }
  func.func @transform_3(%arg0: i32) -> (i32, i32) {
    %c0_i32 = arith.constant 0 : i32
    %c0_i32_0 = arith.constant 0 : i32
    %c0_i32_1 = arith.constant 0 : i32
    return %c0_i32, %c0_i32_0 : i32, i32
  }
  func.func @transform_4(%arg0: i32) -> (i32, i32) {
    %c0_i32 = arith.constant 0 : i32
    %c0_i32_0 = arith.constant 0 : i32
    %c0_i32_1 = arith.constant 0 : i32
    return %c0_i32, %c0_i32_0 : i32, i32
  }
  func.func @transform_5(%arg0: i32) -> (i32, i32) {
    %c0_i32 = arith.constant 0 : i32
    %c0_i32_0 = arith.constant 0 : i32
    %c0_i32_1 = arith.constant 0 : i32
    return %c0_i32, %c0_i32_0 : i32, i32
  }
  func.func @transform_6(%arg0: i32) -> (i32, i32) {
    %c0_i32 = arith.constant 0 : i32
    %c0_i32_0 = arith.constant 0 : i32
    %c0_i32_1 = arith.constant 0 : i32
    return %c0_i32, %c0_i32_0 : i32, i32
  }
  func.func @transform_7(%arg0: i32) -> (i32, i32) {
    %c0_i32 = arith.constant 0 : i32
    %c0_i32_0 = arith.constant 0 : i32
    %c0_i32_1 = arith.constant 0 : i32
    return %c0_i32, %c0_i32_0 : i32, i32
  }
  func.func @transform_8(%arg0: i32) -> (i32, i32) {
    %c0_i32 = arith.constant 0 : i32
    %c0_i32_0 = arith.constant 0 : i32
    %c0_i32_1 = arith.constant 0 : i32
    return %c0_i32, %c0_i32_0 : i32, i32
  }
  func.func @transform_9(%arg0: i32) -> (i32, i32) {
    %c0_i32 = arith.constant 0 : i32
    %c0_i32_0 = arith.constant 0 : i32
    return %c0_i32, %arg0 : i32, i32
  }
}

</mosaic_0001>

<llo_original>
// kernel: tpu_custom_call.1
$region0: #{tpu_custom_call.1}
  #allocation0 [shape = 'u32[]', space=smem, size = 0x4, offset = 0x4, fixed_abs, tag = 'smem constant byte address 0x4 - core index']
  #allocation1 [shape = 'u32[144,128]{1,0:T(1,128)}', space=vmem, size = 0x12000, scoped, tag = 'internal scratch']
  #allocation2 [shape = 'f32[1,1]{1,0:T(1,128)S(1)}', space=vmem, size = 0x200, scoped, tag = 'scoped memory for tpu_custom_call.1']
  %s0 = inlined_call_operand.vmem [shape: s32[128,10], index: 0, kind: input, shape index: {}]
  %s1 = inlined_call_operand.vmem [shape: f32[10,512], index: 1, kind: input, shape index: {}]
  %s2 = inlined_call_operand.vmem [shape: f32[1,512], index: 2, kind: input, shape index: {}]
  %s3 = inlined_call_operand.hbm [shape: f32[512,128], index: 3, kind: input, shape index: {}]
  %s4 = inlined_call_operand.vmem [shape: f32[1,128], index: 4, kind: input, shape index: {}]
  %s5 = inlined_call_operand.vmem [shape: f32[128,64], index: 5, kind: input, shape index: {}]
  %s6 = inlined_call_operand.vmem [shape: f32[1,64], index: 6, kind: input, shape index: {}]
  %s7 = inlined_call_operand.vmem [shape: f32[1,64], index: 7, kind: input, shape index: {}]
  %s8 = inlined_call_operand.<no memory space> [shape: f32[1,1], index: 8, kind: input, shape index: {}]
  %s9 = inlined_call_operand.hbm [shape: f32[1,128], index: 9, kind: output, shape index: {}]
  %s10 = sld [smem:[#allocation0]]
  $region50: #{tpu_custom_call.1} parent=0
    _
  %s12 = ssub.s32 1, %s10
  %s13 = scalar_select 0, %s12, %s10
  %v14 = vstv %s8
  %15 = vst [vmem:[#allocation2] sm:$0x1] %v14
  $region1: #{tpu_custom_call.1} parent=0
    #allocation3 [shape = 'u8[262144]{0}', space=vmem, size = 0x40000, scoped, tag = 'input window, operand 3, single buffered']
    #allocation4 [shape = 's32[1]{0}', space=sflag, size = 0x4, scoped, tag = 'scoped memory for tpu_custom_call.1']
    #allocation5 [shape = 's32[1]{0}', space=sflag, size = 0x4, scoped, tag = 'scoped memory for tpu_custom_call.1']
    #allocation6 [shape = 'u8[512]{0}', space=vmem, size = 0x400, scoped, tag = 'output window, operand 0, single buffered']
    %16 = vsyncpa [#allocation4], 0
    %17 = vsyncpa [#allocation5], 0
    // Predicated region
    $region2: #{tpu_custom_call.1} parent=1 // pred_check
      _
    $region3: #{tpu_custom_call.1} parent=1 // pred_check_branch
      %19 = sbr.rel (0) target = $region5
    $region4: #{tpu_custom_call.1} parent=1 // pred_region
      _
    $region5: #{tpu_custom_call.1} parent=1 // pred_fallthru
      _
    // Predicated region
    $region6: #{tpu_custom_call.1} parent=1 // pred_check
      _
    $region7: #{tpu_custom_call.1} parent=1 // pred_check_branch
      %21 = sbr.rel (0) target = $region9
    $region8: #{tpu_custom_call.1} parent=1 // pred_region
      _
    $region9: #{tpu_custom_call.1} parent=1 // pred_fallthru
      _
    // Predicated region
    $region10: #{tpu_custom_call.1} parent=1 // pred_check
      _
    $region11: #{tpu_custom_call.1} parent=1 // pred_check_branch
      %23 = sbr.rel (0) target = $region13
    $region12: #{tpu_custom_call.1} parent=1 // pred_region
      _
    $region13: #{tpu_custom_call.1} parent=1 // pred_fallthru
      _
    // Predicated region
    $region14: #{tpu_custom_call.1} parent=1 // pred_check
      _
    $region15: #{tpu_custom_call.1} parent=1 // pred_check_branch
      %25 = sbr.rel (0) target = $region17
    $region16: #{tpu_custom_call.1} parent=1 // pred_region
      %s27 = ssub.s32 8192, 8192
      %28 = vsyncadd [#allocation4], %s27
      %s29 = sshll.u32 [#allocation3], 4
      %s30 = int_to_ptr.vmem [resolvable:$true] %s29
      %35 = dma.hbm_to_vmem [thread:$0]  %s3, 8192, %s30, [#allocation4], 128, 128, 8
    $region17: #{tpu_custom_call.1} parent=1 // pred_fallthru
      _
    // Predicated region
    $region18: #{tpu_custom_call.1} parent=1 // pred_check
      _
    $region19: #{tpu_custom_call.1} parent=1 // pred_check_branch
      %37 = sbr.rel (0) target = $region21
    $region20: #{tpu_custom_call.1} parent=1 // pred_region
      _
    $region21: #{tpu_custom_call.1} parent=1 // pred_fallthru
      _
    // Predicated region
    $region22: #{tpu_custom_call.1} parent=1 // pred_check
      _
    $region23: #{tpu_custom_call.1} parent=1 // pred_check_branch
      %39 = sbr.rel (0) target = $region25
    $region24: #{tpu_custom_call.1} parent=1 // pred_region
      _
    $region25: #{tpu_custom_call.1} parent=1 // pred_fallthru
      _
    // Predicated region
    $region26: #{tpu_custom_call.1} parent=1 // pred_check
      _
    $region27: #{tpu_custom_call.1} parent=1 // pred_check_branch
      %41 = sbr.rel (0) target = $region29
    $region28: #{tpu_custom_call.1} parent=1 // pred_region
      _
    $region29: #{tpu_custom_call.1} parent=1 // pred_fallthru
      _
    // Predicated region
    $region30: #{tpu_custom_call.1} parent=1 // pred_check
      _
    $region31: #{tpu_custom_call.1} parent=1 // pred_check_branch
      %43 = sbr.rel (0) target = $region33
    $region32: #{tpu_custom_call.1} parent=1 // pred_region
      _
    $region33: #{tpu_custom_call.1} parent=1 // pred_fallthru
      _
    // Predicated region
    $region34: #{tpu_custom_call.1} parent=1 // pred_check
      _
    $region35: #{tpu_custom_call.1} parent=1 // pred_check_branch
      %45 = sbr.rel (0) target = $region37
    $region36: #{tpu_custom_call.1} parent=1 // pred_region
      _
    $region37: #{tpu_custom_call.1} parent=1 // pred_fallthru
      _
    // Predicated region
    $region38: #{tpu_custom_call.1} parent=1 // pred_check
      _
    $region39: #{tpu_custom_call.1} parent=1 // pred_check_branch
      %47 = sbr.rel (0) target = $region41
    $region40: #{tpu_custom_call.1} parent=1 // pred_region
      %48 = dma.done [#allocation4], 8192
    $region41: #{tpu_custom_call.1} parent=1 // pred_fallthru
      _
    %v49 = vld [vmem:[%s0] sm:$0xff]
    %v50 = vld [vmem:[%s0 + $0x8] sm:$0xff]
    %v51 = vld [vmem:[%s0 + $0x10] sm:$0xff]
    %v52 = vld [vmem:[%s0 + $0x18] sm:$0xff]
    %v53 = vld [vmem:[%s0 + $0x20] sm:$0xff]
    %v54 = vld [vmem:[%s0 + $0x28] sm:$0xff]
    %v55 = vld [vmem:[%s0 + $0x30] sm:$0xff]
    %v56 = vld [vmem:[%s0 + $0x38] sm:$0xff]
    %v57 = vld [vmem:[%s0 + $0x40] sm:$0xff]
    %v58 = vld [vmem:[%s0 + $0x48] sm:$0xff]
    %v59 = vld [vmem:[%s0 + $0x50] sm:$0xff]
    %v60 = vld [vmem:[%s0 + $0x58] sm:$0xff]
    %v61 = vld [vmem:[%s0 + $0x60] sm:$0xff]
    %v62 = vld [vmem:[%s0 + $0x68] sm:$0xff]
    %v63 = vld [vmem:[%s0 + $0x70] sm:$0xff]
    %v64 = vld [vmem:[%s0 + $0x78] sm:$0xff]
    %v65 = vcvt.s32.f32 %v49
    %v66 = vcvt.s32.f32 %v50
    %v67 = vcvt.s32.f32 %v51
    %v68 = vcvt.s32.f32 %v52
    %v69 = vcvt.s32.f32 %v53
    %v70 = vcvt.s32.f32 %v54
    %v71 = vcvt.s32.f32 %v55
    %v72 = vcvt.s32.f32 %v56
    %v73 = vcvt.s32.f32 %v57
    %v74 = vcvt.s32.f32 %v58
    %v75 = vcvt.s32.f32 %v59
    %v76 = vcvt.s32.f32 %v60
    %v77 = vcvt.s32.f32 %v61
    %v78 = vcvt.s32.f32 %v62
    %v79 = vcvt.s32.f32 %v63
    %v80 = vcvt.s32.f32 %v64
    %v81 = vld [vmem:[%s1] sm:$0xff]
    %v82 = vld [vmem:[%s1 + $0x8] sm:$0xff]
    %v83 = vld [vmem:[%s1 + $0x10] sm:$0xff]
    %v84 = vld [vmem:[%s1 + $0x18] sm:$0xff]
    %v85 = vld [vmem:[%s1 + $0x20] sm:$0x3]
    %v86 = vld [vmem:[%s1 + $0x28] sm:$0x3]
    %v87 = vld [vmem:[%s1 + $0x30] sm:$0x3]
    %v88 = vld [vmem:[%s1 + $0x38] sm:$0x3]
    %vm89 = vcmask 80896
    %v91 = vsel %vm89, %v65, 0
    %v94 = vsel %vm89, %v66, 0
    %v97 = vsel %vm89, %v67, 0
    %v100 = vsel %vm89, %v68, 0
    %v103 = vsel %vm89, %v69, 0
    %v106 = vsel %vm89, %v70, 0
    %v109 = vsel %vm89, %v71, 0
    %v112 = vsel %vm89, %v72, 0
    %v115 = vsel %vm89, %v73, 0
    %v118 = vsel %vm89, %v74, 0
    %v121 = vsel %vm89, %v75, 0
    %v124 = vsel %vm89, %v76, 0
    %v127 = vsel %vm89, %v77, 0
    %v130 = vsel %vm89, %v78, 0
    %v133 = vsel %vm89, %v79, 0
    %v136 = vsel %vm89, %v80, 0
    %vm138 = vcmask 1041408
    %v140 = vsel %vm138, %v85, 0
    %v143 = vsel %vm138, %v86, 0
    %v146 = vsel %vm138, %v87, 0
    %v149 = vsel %vm138, %v88, 0
    %151 = vmatprep.subr.mxu0 %v82
    %152 = vmatpush1.msra.mxu0 %v81
    %153 = vmatprep.subr.mxu0 %v143
    %154 = vmatpush1.msra.mxu0 %v140
    %155 = vmatprep.subr.mxu0 0.0
    %156 = vmatpush1.msra.mxu0 0.0
    %157 = vmatprep.subr.mxu0 0.0
    %158 = vmatpush1.msra.mxu0 0.0
    %159 = vmatprep.subr.mxu0 0.0
    %160 = vmatpush1.msra.mxu0 0.0
    %161 = vmatprep.subr.mxu0 0.0
    %162 = vmatpush1.msra.mxu0 0.0
    %163 = vmatprep.subr.mxu0 0.0
    %164 = vmatpush1.msra.mxu0 0.0
    %165 = vmatprep.subr.mxu0 0.0
    %166 = vmatpush1.msra.mxu0 0.0
    %167 = vmatprep.subr.mxu0 0.0
    %168 = vmatpush1.msra.mxu0 0.0
    %169 = vmatprep.subr.mxu0 0.0
    %170 = vmatpush1.msra.mxu0 0.0
    %171 = vmatprep.subr.mxu0 0.0
    %172 = vmatpush1.msra.mxu0 0.0
    %173 = vmatprep.subr.mxu0 0.0
    %174 = vmatpush1.msra.mxu0 0.0
    %175 = vmatprep.subr.mxu0 0.0
    %176 = vmatpush1.msra.mxu0 0.0
    %177 = vmatprep.subr.mxu0 0.0
    %178 = vmatpush1.msra.mxu0 0.0
    %179 = vmatprep.subr.mxu0 0.0
    %180 = vmatpush1.msra.mxu0 0.0
    %181 = vmatprep.subr.mxu0 0.0
    %182 = vmatpush1.msra.mxu0 0.0
    %183 = vmatprep.subr.mxu0 0.0
    %184 = vmatpush1.msra.mxu0 0.0
    %185 = vmatprep.subr.mxu0 0.0
    %186 = vmatpush1.msra.mxu0 0.0
    %187 = vmatprep.subr.mxu0 0.0
    %188 = vmatpush1.msra.mxu0 0.0
    %189 = vmatprep.subr.mxu0 0.0
    %190 = vmatpush1.msra.mxu0 0.0
    %191 = vmatprep.subr.mxu0 0.0
    %192 = vmatpush1.msra.mxu0 0.0
    %193 = vmatprep.subr.mxu0 0.0
    %194 = vmatpush1.msra.mxu0 0.0
    %195 = vmatprep.subr.mxu0 0.0
    %196 = vmatpush1.msra.mxu0 0.0
    %197 = vmatprep.subr.mxu0 0.0
    %198 = vmatpush1.msra.mxu0 0.0
    %199 = vmatprep.subr.mxu0 0.0
    %200 = vmatpush1.msra.mxu0 0.0
    %201 = vmatprep.subr.mxu0 0.0
    %202 = vmatpush1.msra.mxu0 0.0
    %203 = vmatprep.subr.mxu0 0.0
    %204 = vmatpush1.msra.mxu0 0.0
    %205 = vmatprep.subr.mxu0 0.0
    %206 = vmatpush1.msra.mxu0 0.0
    %207 = vmatprep.subr.mxu0 0.0
    %208 = vmatpush1.msra.mxu0 0.0
    %209 = vmatprep.subr.mxu0 0.0
    %210 = vmatpush1.msra.mxu0 0.0
    %211 = vmatprep.subr.mxu0 0.0
    %212 = vmatpush1.msra.mxu0 0.0
    %213 = vmatprep.subr.mxu0 0.0
    %214 = vmatpush1.msra.mxu0 0.0
    %215 = vmatprep.mubr.f32.mxu0 0.0
    %216 = vmatmul.mubr.f32.gmra.mrb[0].mxu0 %v91
    %v217 = vpop.f32.mrb[0].mxu0
    %v218 = vadd.f32 0.0, %v217
    %v219 = vpop.f32.mrb[0].mxu0
    %v220 = vadd.f32 0.0, %v219
    %221 = vmatprep.mubr.f32.mxu0 0.0
    %222 = vmatmul.mubr.f32.gmra.mrb[0].mxu0 %v94
    %v223 = vpop.f32.mrb[0].mxu0
    %v224 = vadd.f32 0.0, %v223
    %v225 = vpop.f32.mrb[0].mxu0
    %v226 = vadd.f32 0.0, %v225
    %227 = vmatprep.mubr.f32.mxu0 0.0
    %228 = vmatmul.mubr.f32.gmra.mrb[0].mxu0 %v97
    %v229 = vpop.f32.mrb[0].mxu0
    %v230 = vadd.f32 0.0, %v229
    %v231 = vpop.f32.mrb[0].mxu0
    %v232 = vadd.f32 0.0, %v231
    %233 = vmatprep.mubr.f32.mxu0 0.0
    %234 = vmatmul.mubr.f32.gmra.mrb[0].mxu0 %v100
    %v235 = vpop.f32.mrb[0].mxu0
    %v236 = vadd.f32 0.0, %v235
    %v237 = vpop.f32.mrb[0].mxu0
    %v238 = vadd.f32 0.0, %v237
    %239 = vmatprep.mubr.f32.mxu0 0.0
    %240 = vmatmul.mubr.f32.gmra.mrb[0].mxu0 %v103
    %v241 = vpop.f32.mrb[0].mxu0
    %v242 = vadd.f32 0.0, %v241
    %v243 = vpop.f32.mrb[0].mxu0
    %v244 = vadd.f32 0.0, %v243
    %245 = vmatprep.mubr.f32.mxu0 0.0
    %246 = vmatmul.mubr.f32.gmra.mrb[0].mxu0 %v106
    %v247 = vpop.f32.mrb[0].mxu0
    %v248 = vadd.f32 0.0, %v247
    %v249 = vpop.f32.mrb[0].mxu0
    %v250 = vadd.f32 0.0, %v249
    %251 = vmatprep.mubr.f32.mxu0 0.0
    %252 = vmatmul.mubr.f32.gmra.mrb[0].mxu0 %v109
    %v253 = vpop.f32.mrb[0].mxu0
    %v254 = vadd.f32 0.0, %v253
    %v255 = vpop.f32.mrb[0].mxu0
    %v256 = vadd.f32 0.0, %v255
    %257 = vmatprep.mubr.f32.mxu0 0.0
    %258 = vmatmul.mubr.f32.gmra.mrb[0].mxu0 %v112
    %v259 = vpop.f32.mrb[0].mxu0
    %v260 = vadd.f32 0.0, %v259
    %v261 = vpop.f32.mrb[0].mxu0
    %v262 = vadd.f32 0.0, %v261
    %263 = vmatprep.mubr.f32.mxu0 0.0
    %264 = vmatmul.mubr.f32.gmra.mrb[0].mxu0 %v115
    %v265 = vpop.f32.mrb[0].mxu0
    %v266 = vadd.f32 0.0, %v265
    %v267 = vpop.f32.mrb[0].mxu0
    %v268 = vadd.f32 0.0, %v267
    %269 = vmatprep.mubr.f32.mxu0 0.0
    %270 = vmatmul.mubr.f32.gmra.mrb[0].mxu0 %v118
    %v271 = vpop.f32.mrb[0].mxu0
    %v272 = vadd.f32 0.0, %v271
    %v273 = vpop.f32.mrb[0].mxu0
    %v274 = vadd.f32 0.0, %v273
    %275 = vmatprep.mubr.f32.mxu0 0.0
    %276 = vmatmul.mubr.f32.gmra.mrb[0].mxu0 %v121
    %v277 = vpop.f32.mrb[0].mxu0
    %v278 = vadd.f32 0.0, %v277
    %v279 = vpop.f32.mrb[0].mxu0
    %v280 = vadd.f32 0.0, %v279
    %281 = vmatprep.mubr.f32.mxu0 0.0
    %282 = vmatmul.mubr.f32.gmra.mrb[0].mxu0 %v124
    %v283 = vpop.f32.mrb[0].mxu0
    %v284 = vadd.f32 0.0, %v283
    %v285 = vpop.f32.mrb[0].mxu0
    %v286 = vadd.f32 0.0, %v285
    %287 = vmatprep.mubr.f32.mxu0 0.0
    %288 = vmatmul.mubr.f32.gmra.mrb[0].mxu0 %v127
    %v289 = vpop.f32.mrb[0].mxu0
    %v290 = vadd.f32 0.0, %v289
    %v291 = vpop.f32.mrb[0].mxu0
    %v292 = vadd.f32 0.0, %v291
    %293 = vmatprep.mubr.f32.mxu0 0.0
    %294 = vmatmul.mubr.f32.gmra.mrb[0].mxu0 %v130
    %v295 = vpop.f32.mrb[0].mxu0
    %v296 = vadd.f32 0.0, %v295
    %v297 = vpop.f32.mrb[0].mxu0
    %v298 = vadd.f32 0.0, %v297
    %299 = vmatprep.mubr.f32.mxu0 0.0
    %300 = vmatmul.mubr.f32.gmra.mrb[0].mxu0 %v133
    %v301 = vpop.f32.mrb[0].mxu0
    %v302 = vadd.f32 0.0, %v301
    %v303 = vpop.f32.mrb[0].mxu0
    %v304 = vadd.f32 0.0, %v303
    %305 = vmatprep.mubr.f32.mxu0 0.0
    %306 = vmatmul.mubr.f32.gmra.mrb[0].mxu0 %v136
    %v307 = vpop.f32.mrb[0].mxu0
    %v308 = vadd.f32 0.0, %v307
    %v309 = vpop.f32.mrb[0].mxu0
    %v310 = vadd.f32 0.0, %v309
    %311 = vdwg.mxu0
    %312 = vmatprep.subr.mxu0 %v84
    %313 = vmatpush1.msra.mxu0 %v83
    %314 = vmatprep.subr.mxu0 %v149
    %315 = vmatpush1.msra.mxu0 %v146
    %316 = vmatprep.subr.mxu0 0.0
    %317 = vmatpush1.msra.mxu0 0.0
    %318 = vmatprep.subr.mxu0 0.0
    %319 = vmatpush1.msra.mxu0 0.0
    %320 = vmatprep.subr.mxu0 0.0
    %321 = vmatpush1.msra.mxu0 0.0
    %322 = vmatprep.subr.mxu0 0.0
    %323 = vmatpush1.msra.mxu0 0.0
    %324 = vmatprep.subr.mxu0 0.0
    %325 = vmatpush1.msra.mxu0 0.0
    %326 = vmatprep.subr.mxu0 0.0
    %327 = vmatpush1.msra.mxu0 0.0
    %328 = vmatprep.subr.mxu0 0.0
    %329 = vmatpush1.msra.mxu0 0.0
    %330 = vmatprep.subr.mxu0 0.0
    %331 = vmatpush1.msra.mxu0 0.0
    %332 = vmatprep.subr.mxu0 0.0
    %333 = vmatpush1.msra.mxu0 0.0
    %334 = vmatprep.subr.mxu0 0.0
    %335 = vmatpush1.msra.mxu0 0.0
    %336 = vmatprep.subr.mxu0 0.0
    %337 = vmatpush1.msra.mxu0 0.0
    %338 = vmatprep.subr.mxu0 0.0
    %339 = vmatpush1.msra.mxu0 0.0
    %340 = vmatprep.subr.mxu0 0.0
    %341 = vmatpush1.msra.mxu0 0.0
    %342 = vmatprep.subr.mxu0 0.0
    %343 = vmatpush1.msra.mxu0 0.0
    %344 = vmatprep.subr.mxu0 0.0
    %345 = vmatpush1.msra.mxu0 0.0
    %346 = vmatprep.subr.mxu0 0.0
    %347 = vmatpush1.msra.mxu0 0.0
    %348 = vmatprep.subr.mxu0 0.0
    %349 = vmatpush1.msra.mxu0 0.0
    %350 = vmatprep.subr.mxu0 0.0
    %351 = vmatpush1.msra.mxu0 0.0
    %352 = vmatprep.subr.mxu0 0.0
    %353 = vmatpush1.msra.mxu0 0.0
    %354 = vmatprep.subr.mxu0 0.0
    %355 = vmatpush1.msra.mxu0 0.0
    %356 = vmatprep.subr.mxu0 0.0
    %357 = vmatpush1.msra.mxu0 0.0
    %358 = vmatprep.subr.mxu0 0.0
    %359 = vmatpush1.msra.mxu0 0.0
    %360 = vmatprep.subr.mxu0 0.0
    %361 = vmatpush1.msra.mxu0 0.0
    %362 = vmatprep.subr.mxu0 0.0
    %363 = vmatpush1.msra.mxu0 0.0
    %364 = vmatprep.subr.mxu0 0.0
    %365 = vmatpush1.msra.mxu0 0.0
    %366 = vmatprep.subr.mxu0 0.0
    %367 = vmatpush1.msra.mxu0 0.0
    %368 = vmatprep.subr.mxu0 0.0
    %369 = vmatpush1.msra.mxu0 0.0
    %370 = vmatprep.subr.mxu0 0.0
    %371 = vmatpush1.msra.mxu0 0.0
    %372 = vmatprep.subr.mxu0 0.0
    %373 = vmatpush1.msra.mxu0 0.0
    %374 = vmatprep.subr.mxu0 0.0
    %375 = vmatpush1.msra.mxu0 0.0
    %376 = vmatprep.mubr.f32.mxu0 0.0
    %377 = vmatmul.mubr.f32.gmra.mrb[0].mxu0 %v91
    %v378 = vpop.f32.mrb[0].mxu0
    %v379 = vadd.f32 0.0, %v378
    %v380 = vpop.f32.mrb[0].mxu0
    %v381 = vadd.f32 0.0, %v380
    %382 = vmatprep.mubr.f32.mxu0 0.0
    %383 = vmatmul.mubr.f32.gmra.mrb[0].mxu0 %v94
    %v384 = vpop.f32.mrb[0].mxu0
    %v385 = vadd.f32 0.0, %v384
    %v386 = vpop.f32.mrb[0].mxu0
    %v387 = vadd.f32 0.0, %v386
    %388 = vmatprep.mubr.f32.mxu0 0.0
    %389 = vmatmul.mubr.f32.gmra.mrb[0].mxu0 %v97
    %v390 = vpop.f32.mrb[0].mxu0
    %v391 = vadd.f32 0.0, %v390
    %v392 = vpop.f32.mrb[0].mxu0
    %v393 = vadd.f32 0.0, %v392
    %394 = vmatprep.mubr.f32.mxu0 0.0
    %395 = vmatmul.mubr.f32.gmra.mrb[0].mxu0 %v100
    %v396 = vpop.f32.mrb[0].mxu0
    %v397 = vadd.f32 0.0, %v396
    %v398 = vpop.f32.mrb[0].mxu0
    %v399 = vadd.f32 0.0, %v398
    %400 = vmatprep.mubr.f32.mxu0 0.0
    %401 = vmatmul.mubr.f32.gmra.mrb[0].mxu0 %v103
    %v402 = vpop.f32.mrb[0].mxu0
    %v403 = vadd.f32 0.0, %v402
    %v404 = vpop.f32.mrb[0].mxu0
    %v405 = vadd.f32 0.0, %v404
    %406 = vmatprep.mubr.f32.mxu0 0.0
    %407 = vmatmul.mubr.f32.gmra.mrb[0].mxu0 %v106
    %v408 = vpop.f32.mrb[0].mxu0
    %v409 = vadd.f32 0.0, %v408
    %v410 = vpop.f32.mrb[0].mxu0
    %v411 = vadd.f32 0.0, %v410
    %412 = vmatprep.mubr.f32.mxu0 0.0
    %413 = vmatmul.mubr.f32.gmra.mrb[0].mxu0 %v109
    %v414 = vpop.f32.mrb[0].mxu0
    %v415 = vadd.f32 0.0, %v414
    %v416 = vpop.f32.mrb[0].mxu0
    %v417 = vadd.f32 0.0, %v416
    %418 = vmatprep.mubr.f32.mxu0 0.0
    %419 = vmatmul.mubr.f32.gmra.mrb[0].mxu0 %v112
    %v420 = vpop.f32.mrb[0].mxu0
    %v421 = vadd.f32 0.0, %v420
    %v422 = vpop.f32.mrb[0].mxu0
    %v423 = vadd.f32 0.0, %v422
    %424 = vmatprep.mubr.f32.mxu0 0.0
    %425 = vmatmul.mubr.f32.gmra.mrb[0].mxu0 %v115
    %v426 = vpop.f32.mrb[0].mxu0
    %v427 = vadd.f32 0.0, %v426
    %v428 = vpop.f32.mrb[0].mxu0
    %v429 = vadd.f32 0.0, %v428
    %430 = vmatprep.mubr.f32.mxu0 0.0
    %431 = vmatmul.mubr.f32.gmra.mrb[0].mxu0 %v118
    %v432 = vpop.f32.mrb[0].mxu0
    %v433 = vadd.f32 0.0, %v432
    %v434 = vpop.f32.mrb[0].mxu0
    %v435 = vadd.f32 0.0, %v434
    %436 = vmatprep.mubr.f32.mxu0 0.0
    %437 = vmatmul.mubr.f32.gmra.mrb[0].mxu0 %v121
    %v438 = vpop.f32.mrb[0].mxu0
    %v439 = vadd.f32 0.0, %v438
    %v440 = vpop.f32.mrb[0].mxu0
    %v441 = vadd.f32 0.0, %v440
    %442 = vmatprep.mubr.f32.mxu0 0.0
    %443 = vmatmul.mubr.f32.gmra.mrb[0].mxu0 %v124
    %v444 = vpop.f32.mrb[0].mxu0
    %v445 = vadd.f32 0.0, %v444
    %v446 = vpop.f32.mrb[0].mxu0
    %v447 = vadd.f32 0.0, %v446
    %448 = vmatprep.mubr.f32.mxu0 0.0
    %449 = vmatmul.mubr.f32.gmra.mrb[0].mxu0 %v127
    %v450 = vpop.f32.mrb[0].mxu0
    %v451 = vadd.f32 0.0, %v450
    %v452 = vpop.f32.mrb[0].mxu0
    %v453 = vadd.f32 0.0, %v452
    %454 = vmatprep.mubr.f32.mxu0 0.0
    %455 = vmatmul.mubr.f32.gmra.mrb[0].mxu0 %v130
    %v456 = vpop.f32.mrb[0].mxu0
    %v457 = vadd.f32 0.0, %v456
    %v458 = vpop.f32.mrb[0].mxu0
    %v459 = vadd.f32 0.0, %v458
    %460 = vmatprep.mubr.f32.mxu0 0.0
    %461 = vmatmul.mubr.f32.gmra.mrb[0].mxu0 %v133
    %v462 = vpop.f32.mrb[0].mxu0
    %v463 = vadd.f32 0.0, %v462
    %v464 = vpop.f32.mrb[0].mxu0
    %v465 = vadd.f32 0.0, %v464
    %466 = vmatprep.mubr.f32.mxu0 0.0
    %467 = vmatmul.mubr.f32.gmra.mrb[0].mxu0 %v136
    %v468 = vpop.f32.mrb[0].mxu0
    %v469 = vadd.f32 0.0, %v468
    %v470 = vpop.f32.mrb[0].mxu0
    %v471 = vadd.f32 0.0, %v470
    %472 = vdwg.mxu0
    %v473 = vld [vmem:[%s2] sm:$0xf]
    %v475 = vlaneseq
    %v476 = vshrl.u32 %v475, 7
    %v477 = vsub.s32 0, %v476
    %v478 = vrot.slane %v473, %v477
    %v479 = vlaneseq
    %v480 = vshrl.u32 %v479, 7
    %v481 = vsub.s32 1, %v480
    %v482 = vrot.slane %v473, %v481
    %v483 = vlaneseq
    %v484 = vshrl.u32 %v483, 7
    %v485 = vsub.s32 2, %v484
    %v486 = vrot.slane %v473, %v485
    %v487 = vlaneseq
    %v488 = vshrl.u32 %v487, 7
    %v489 = vsub.s32 3, %v488
    %v490 = vrot.slane %v473, %v489
    %vm495 = vcmp.eq.f32.partialorder %v218, %v478
    %vm496 = vcmp.eq.f32.partialorder %v220, %v482
    %vm497 = vcmp.eq.f32.partialorder %v379, %v486
    %vm498 = vcmp.eq.f32.partialorder %v381, %v490
    %vm499 = vcmp.eq.f32.partialorder %v224, %v478
    %vm500 = vcmp.eq.f32.partialorder %v226, %v482
    %vm501 = vcmp.eq.f32.partialorder %v385, %v486
    %vm502 = vcmp.eq.f32.partialorder %v387, %v490
    %vm503 = vcmp.eq.f32.partialorder %v230, %v478
    %vm504 = vcmp.eq.f32.partialorder %v232, %v482
    %vm505 = vcmp.eq.f32.partialorder %v391, %v486
    %vm506 = vcmp.eq.f32.partialorder %v393, %v490
    %vm507 = vcmp.eq.f32.partialorder %v236, %v478
    %vm508 = vcmp.eq.f32.partialorder %v238, %v482
    %vm509 = vcmp.eq.f32.partialorder %v397, %v486
    %vm510 = vcmp.eq.f32.partialorder %v399, %v490
    %vm511 = vcmp.eq.f32.partialorder %v242, %v478
    %vm512 = vcmp.eq.f32.partialorder %v244, %v482
    %vm513 = vcmp.eq.f32.partialorder %v403, %v486
    %vm514 = vcmp.eq.f32.partialorder %v405, %v490
    %vm515 = vcmp.eq.f32.partialorder %v248, %v478
    %vm516 = vcmp.eq.f32.partialorder %v250, %v482
    %vm517 = vcmp.eq.f32.partialorder %v409, %v486
    %vm518 = vcmp.eq.f32.partialorder %v411, %v490
    %vm519 = vcmp.eq.f32.partialorder %v254, %v478
    %vm520 = vcmp.eq.f32.partialorder %v256, %v482
    %vm521 = vcmp.eq.f32.partialorder %v415, %v486
    %vm522 = vcmp.eq.f32.partialorder %v417, %v490
    %vm523 = vcmp.eq.f32.partialorder %v260, %v478
    %vm524 = vcmp.eq.f32.partialorder %v262, %v482
    %vm525 = vcmp.eq.f32.partialorder %v421, %v486
    %vm526 = vcmp.eq.f32.partialorder %v423, %v490
    %vm527 = vcmp.eq.f32.partialorder %v266, %v478
    %vm528 = vcmp.eq.f32.partialorder %v268, %v482
    %vm529 = vcmp.eq.f32.partialorder %v427, %v486
    %vm530 = vcmp.eq.f32.partialorder %v429, %v490
    %vm531 = vcmp.eq.f32.partialorder %v272, %v478
    %vm532 = vcmp.eq.f32.partialorder %v274, %v482
    %vm533 = vcmp.eq.f32.partialorder %v433, %v486
    %vm534 = vcmp.eq.f32.partialorder %v435, %v490
    %vm535 = vcmp.eq.f32.partialorder %v278, %v478
    %vm536 = vcmp.eq.f32.partialorder %v280, %v482
    %vm537 = vcmp.eq.f32.partialorder %v439, %v486
    %vm538 = vcmp.eq.f32.partialorder %v441, %v490
    %vm539 = vcmp.eq.f32.partialorder %v284, %v478
    %vm540 = vcmp.eq.f32.partialorder %v286, %v482
    %vm541 = vcmp.eq.f32.partialorder %v445, %v486
    %vm542 = vcmp.eq.f32.partialorder %v447, %v490
    %vm543 = vcmp.eq.f32.partialorder %v290, %v478
    %vm544 = vcmp.eq.f32.partialorder %v292, %v482
    %vm545 = vcmp.eq.f32.partialorder %v451, %v486
    %vm546 = vcmp.eq.f32.partialorder %v453, %v490
    %vm547 = vcmp.eq.f32.partialorder %v296, %v478
    %vm548 = vcmp.eq.f32.partialorder %v298, %v482
    %vm549 = vcmp.eq.f32.partialorder %v457, %v486
    %vm550 = vcmp.eq.f32.partialorder %v459, %v490
    %vm551 = vcmp.eq.f32.partialorder %v302, %v478
    %vm552 = vcmp.eq.f32.partialorder %v304, %v482
    %vm553 = vcmp.eq.f32.partialorder %v463, %v486
    %vm554 = vcmp.eq.f32.partialorder %v465, %v490
    %vm555 = vcmp.eq.f32.partialorder %v308, %v478
    %vm556 = vcmp.eq.f32.partialorder %v310, %v482
    %vm557 = vcmp.eq.f32.partialorder %v469, %v486
    %vm558 = vcmp.eq.f32.partialorder %v471, %v490
    %v559 = vsel %vm495, 1, 0
    %v560 = vsel %vm496, 1, 0
    %v561 = vsel %vm497, 1, 0
    %v562 = vsel %vm498, 1, 0
    %v563 = vsel %vm499, 1, 0
    %v564 = vsel %vm500, 1, 0
    %v565 = vsel %vm501, 1, 0
    %v566 = vsel %vm502, 1, 0
    %v567 = vsel %vm503, 1, 0
    %v568 = vsel %vm504, 1, 0
    %v569 = vsel %vm505, 1, 0
    %v570 = vsel %vm506, 1, 0
    %v571 = vsel %vm507, 1, 0
    %v572 = vsel %vm508, 1, 0
    %v573 = vsel %vm509, 1, 0
    %v574 = vsel %vm510, 1, 0
    %v575 = vsel %vm511, 1, 0
    %v576 = vsel %vm512, 1, 0
    %v577 = vsel %vm513, 1, 0
    %v578 = vsel %vm514, 1, 0
    %v579 = vsel %vm515, 1, 0
    %v580 = vsel %vm516, 1, 0
    %v581 = vsel %vm517, 1, 0
    %v582 = vsel %vm518, 1, 0
    %v583 = vsel %vm519, 1, 0
    %v584 = vsel %vm520, 1, 0
    %v585 = vsel %vm521, 1, 0
    %v586 = vsel %vm522, 1, 0
    %v587 = vsel %vm523, 1, 0
    %v588 = vsel %vm524, 1, 0
    %v589 = vsel %vm525, 1, 0
    %v590 = vsel %vm526, 1, 0
    %v591 = vsel %vm527, 1, 0
    %v592 = vsel %vm528, 1, 0
    %v593 = vsel %vm529, 1, 0
    %v594 = vsel %vm530, 1, 0
    %v595 = vsel %vm531, 1, 0
    %v596 = vsel %vm532, 1, 0
    %v597 = vsel %vm533, 1, 0
    %v598 = vsel %vm534, 1, 0
    %v599 = vsel %vm535, 1, 0
    %v600 = vsel %vm536, 1, 0
    %v601 = vsel %vm537, 1, 0
    %v602 = vsel %vm538, 1, 0
    %v603 = vsel %vm539, 1, 0
    %v604 = vsel %vm540, 1, 0
    %v605 = vsel %vm541, 1, 0
    %v606 = vsel %vm542, 1, 0
    %v607 = vsel %vm543, 1, 0
    %v608 = vsel %vm544, 1, 0
    %v609 = vsel %vm545, 1, 0
    %v610 = vsel %vm546, 1, 0
    %v611 = vsel %vm547, 1, 0
    %v612 = vsel %vm548, 1, 0
    %v613 = vsel %vm549, 1, 0
    %v614 = vsel %vm550, 1, 0
    %v615 = vsel %vm551, 1, 0
    %v616 = vsel %vm552, 1, 0
    %v617 = vsel %vm553, 1, 0
    %v618 = vsel %vm554, 1, 0
    %v619 = vsel %vm555, 1, 0
    %v620 = vsel %vm556, 1, 0
    %v621 = vsel %vm557, 1, 0
    %v622 = vsel %vm558, 1, 0
    %v623 = vcvt.s32.f32 %v559
    %v624 = vcvt.s32.f32 %v560
    %v625 = vcvt.s32.f32 %v561
    %v626 = vcvt.s32.f32 %v562
    %v627 = vcvt.s32.f32 %v563
    %v628 = vcvt.s32.f32 %v564
    %v629 = vcvt.s32.f32 %v565
    %v630 = vcvt.s32.f32 %v566
    %v631 = vcvt.s32.f32 %v567
    %v632 = vcvt.s32.f32 %v568
    %v633 = vcvt.s32.f32 %v569
    %v634 = vcvt.s32.f32 %v570
    %v635 = vcvt.s32.f32 %v571
    %v636 = vcvt.s32.f32 %v572
    %v637 = vcvt.s32.f32 %v573
    %v638 = vcvt.s32.f32 %v574
    %v639 = vcvt.s32.f32 %v575
    %v640 = vcvt.s32.f32 %v576
    %v641 = vcvt.s32.f32 %v577
    %v642 = vcvt.s32.f32 %v578
    %v643 = vcvt.s32.f32 %v579
    %v644 = vcvt.s32.f32 %v580
    %v645 = vcvt.s32.f32 %v581
    %v646 = vcvt.s32.f32 %v582
    %v647 = vcvt.s32.f32 %v583
    %v648 = vcvt.s32.f32 %v584
    %v649 = vcvt.s32.f32 %v585
    %v650 = vcvt.s32.f32 %v586
    %v651 = vcvt.s32.f32 %v587
    %v652 = vcvt.s32.f32 %v588
    %v653 = vcvt.s32.f32 %v589
    %v654 = vcvt.s32.f32 %v590
    %v655 = vcvt.s32.f32 %v591
    %v656 = vcvt.s32.f32 %v592
    %v657 = vcvt.s32.f32 %v593
    %v658 = vcvt.s32.f32 %v594
    %v659 = vcvt.s32.f32 %v595
    %v660 = vcvt.s32.f32 %v596
    %v661 = vcvt.s32.f32 %v597
    %v662 = vcvt.s32.f32 %v598
    %v663 = vcvt.s32.f32 %v599
    %v664 = vcvt.s32.f32 %v600
    %v665 = vcvt.s32.f32 %v601
    %v666 = vcvt.s32.f32 %v602
    %v667 = vcvt.s32.f32 %v603
    %v668 = vcvt.s32.f32 %v604
    %v669 = vcvt.s32.f32 %v605
    %v670 = vcvt.s32.f32 %v606
    %v671 = vcvt.s32.f32 %v607
    %v672 = vcvt.s32.f32 %v608
    %v673 = vcvt.s32.f32 %v609
    %v674 = vcvt.s32.f32 %v610
    %v675 = vcvt.s32.f32 %v611
    %v676 = vcvt.s32.f32 %v612
    %v677 = vcvt.s32.f32 %v613
    %v678 = vcvt.s32.f32 %v614
    %v679 = vcvt.s32.f32 %v615
    %v680 = vcvt.s32.f32 %v616
    %v681 = vcvt.s32.f32 %v617
    %v682 = vcvt.s32.f32 %v618
    %v683 = vcvt.s32.f32 %v619
    %v684 = vcvt.s32.f32 %v620
    %v685 = vcvt.s32.f32 %v621
    %v686 = vcvt.s32.f32 %v622
    %v687 = vld [vmem:[#allocation3] sm:$0xff]
    %v688 = vld [vmem:[#allocation3 + $0x8] sm:$0xff]
    %v689 = vld [vmem:[#allocation3 + $0x10] sm:$0xff]
    %v690 = vld [vmem:[#allocation3 + $0x18] sm:$0xff]
    %v691 = vld [vmem:[#allocation3 + $0x20] sm:$0xff]
    %v692 = vld [vmem:[#allocation3 + $0x28] sm:$0xff]
    %v693 = vld [vmem:[#allocation3 + $0x30] sm:$0xff]
    %v694 = vld [vmem:[#allocation3 + $0x38] sm:$0xff]
    %v695 = vld [vmem:[#allocation3 + $0x40] sm:$0xff]
    %v696 = vld [vmem:[#allocation3 + $0x48] sm:$0xff]
    %v697 = vld [vmem:[#allocation3 + $0x50] sm:$0xff]
    %v698 = vld [vmem:[#allocation3 + $0x58] sm:$0xff]
    %v699 = vld [vmem:[#allocation3 + $0x60] sm:$0xff]
    %v700 = vld [vmem:[#allocation3 + $0x68] sm:$0xff]
    %v701 = vld [vmem:[#allocation3 + $0x70] sm:$0xff]
    %v702 = vld [vmem:[#allocation3 + $0x78] sm:$0xff]
    %v703 = vld [vmem:[#allocation3 + $0x80] sm:$0xff]
    %v704 = vld [vmem:[#allocation3 + $0x88] sm:$0xff]
    %v705 = vld [vmem:[#allocation3 + $0x90] sm:$0xff]
    %v706 = vld [vmem:[#allocation3 + $0x98] sm:$0xff]
    %v707 = vld [vmem:[#allocation3 + $0xa0] sm:$0xff]
    %v708 = vld [vmem:[#allocation3 + $0xa8] sm:$0xff]
    %v709 = vld [vmem:[#allocation3 + $0xb0] sm:$0xff]
    %v710 = vld [vmem:[#allocation3 + $0xb8] sm:$0xff]
    %v711 = vld [vmem:[#allocation3 + $0xc0] sm:$0xff]
    %v712 = vld [vmem:[#allocation3 + $0xc8] sm:$0xff]
    %v713 = vld [vmem:[#allocation3 + $0xd0] sm:$0xff]
    %v714 = vld [vmem:[#allocation3 + $0xd8] sm:$0xff]
    %v715 = vld [vmem:[#allocation3 + $0xe0] sm:$0xff]
    %v716 = vld [vmem:[#allocation3 + $0xe8] sm:$0xff]
    %v717 = vld [vmem:[#allocation3 + $0xf0] sm:$0xff]
    %v718 = vld [vmem:[#allocation3 + $0xf8] sm:$0xff]
    %v719 = vld [vmem:[#allocation3 + $0x100] sm:$0xff]
    %v720 = vld [vmem:[#allocation3 + $0x108] sm:$0xff]
    %v721 = vld [vmem:[#allocation3 + $0x110] sm:$0xff]
    %v722 = vld [vmem:[#allocation3 + $0x118] sm:$0xff]
    %v723 = vld [vmem:[#allocation3 + $0x120] sm:$0xff]
    %v724 = vld [vmem:[#allocation3 + $0x128] sm:$0xff]
    %v725 = vld [vmem:[#allocation3 + $0x130] sm:$0xff]
    %v726 = vld [vmem:[#allocation3 + $0x138] sm:$0xff]
    %v727 = vld [vmem:[#allocation3 + $0x140] sm:$0xff]
    %v728 = vld [vmem:[#allocation3 + $0x148] sm:$0xff]
    %v729 = vld [vmem:[#allocation3 + $0x150] sm:$0xff]
    %v730 = vld [vmem:[#allocation3 + $0x158] sm:$0xff]
    %v731 = vld [vmem:[#allocation3 + $0x160] sm:$0xff]
    %v732 = vld [vmem:[#allocation3 + $0x168] sm:$0xff]
    %v733 = vld [vmem:[#allocation3 + $0x170] sm:$0xff]
    %v734 = vld [vmem:[#allocation3 + $0x178] sm:$0xff]
    %v735 = vld [vmem:[#allocation3 + $0x180] sm:$0xff]
    %v736 = vld [vmem:[#allocation3 + $0x188] sm:$0xff]
    %v737 = vld [vmem:[#allocation3 + $0x190] sm:$0xff]
    %v738 = vld [vmem:[#allocation3 + $0x198] sm:$0xff]
    %v739 = vld [vmem:[#allocation3 + $0x1a0] sm:$0xff]
    %v740 = vld [vmem:[#allocation3 + $0x1a8] sm:$0xff]
    %v741 = vld [vmem:[#allocation3 + $0x1b0] sm:$0xff]
    %v742 = vld [vmem:[#allocation3 + $0x1b8] sm:$0xff]
    %v743 = vld [vmem:[#allocation3 + $0x1c0] sm:$0xff]
    %v744 = vld [vmem:[#allocation3 + $0x1c8] sm:$0xff]
    %v745 = vld [vmem:[#allocation3 + $0x1d0] sm:$0xff]
    %v746 = vld [vmem:[#allocation3 + $0x1d8] sm:$0xff]
    %v747 = vld [vmem:[#allocation3 + $0x1e0] sm:$0xff]
    %v748 = vld [vmem:[#allocation3 + $0x1e8] sm:$0xff]
    %v749 = vld [vmem:[#allocation3 + $0x1f0] sm:$0xff]
    %v750 = vld [vmem:[#allocation3 + $0x1f8] sm:$0xff]
    %v751 = vld [vmem:[%s4] sm:$0x1]
    %v753 = vlaneseq
    %v754 = vshrl.u32 %v753, 7
    %v755 = vsub.s32 0, %v754
    %v756 = vrot.slane %v751, %v755
    %758 = vmatprep.subr.mxu0 0.0
    %759 = vmatpush1.msra.mxu0 %v687
    %760 = vmatprep.subr.mxu0 0.0
    %761 = vmatpush1.msra.mxu0 %v688
    %762 = vmatprep.subr.mxu0 0.0
    %763 = vmatpush1.msra.mxu0 %v689
    %764 = vmatprep.subr.mxu0 0.0
    %765 = vmatpush1.msra.mxu0 %v690
    %766 = vmatprep.subr.mxu0 0.0
    %767 = vmatpush1.msra.mxu0 %v691
    %768 = vmatprep.subr.mxu0 0.0
    %769 = vmatpush1.msra.mxu0 %v692
    %770 = vmatprep.subr.mxu0 0.0
    %771 = vmatpush1.msra.mxu0 %v693
    %772 = vmatprep.subr.mxu0 0.0
    %773 = vmatpush1.msra.mxu0 %v694
    %774 = vmatprep.subr.mxu0 0.0
    %775 = vmatpush1.msra.mxu0 %v695
    %776 = vmatprep.subr.mxu0 0.0
    %777 = vmatpush1.msra.mxu0 %v696
    %778 = vmatprep.subr.mxu0 0.0
    %779 = vmatpush1.msra.mxu0 %v697
    %780 = vmatprep.subr.mxu0 0.0
    %781 = vmatpush1.msra.mxu0 %v698
    %782 = vmatprep.subr.mxu0 0.0
    %783 = vmatpush1.msra.mxu0 %v699
    %784 = vmatprep.subr.mxu0 0.0
    %785 = vmatpush1.msra.mxu0 %v700
    %786 = vmatprep.subr.mxu0 0.0
    %787 = vmatpush1.msra.mxu0 %v701
    %788 = vmatprep.subr.mxu0 0.0
    %789 = vmatpush1.msra.mxu0 %v702
    %790 = vmatprep.subr.mxu0 0.0
    %791 = vmatpush1.msra.mxu0 %v703
    %792 = vmatprep.subr.mxu0 0.0
    %793 = vmatpush1.msra.mxu0 %v704
    %794 = vmatprep.subr.mxu0 0.0
    %795 = vmatpush1.msra.mxu0 %v705
    %796 = vmatprep.subr.mxu0 0.0
    %797 = vmatpush1.msra.mxu0 %v706
    %798 = vmatprep.subr.mxu0 0.0
    %799 = vmatpush1.msra.mxu0 %v707
    %800 = vmatprep.subr.mxu0 0.0
    %801 = vmatpush1.msra.mxu0 %v708
    %802 = vmatprep.subr.mxu0 0.0
    %803 = vmatpush1.msra.mxu0 %v709
    %804 = vmatprep.subr.mxu0 0.0
    %805 = vmatpush1.msra.mxu0 %v710
    %806 = vmatprep.subr.mxu0 0.0
    %807 = vmatpush1.msra.mxu0 %v711
    %808 = vmatprep.subr.mxu0 0.0
    %809 = vmatpush1.msra.mxu0 %v712
    %810 = vmatprep.subr.mxu0 0.0
    %811 = vmatpush1.msra.mxu0 %v713
    %812 = vmatprep.subr.mxu0 0.0
    %813 = vmatpush1.msra.mxu0 %v714
    %814 = vmatprep.subr.mxu0 0.0
    %815 = vmatpush1.msra.mxu0 %v715
    %816 = vmatprep.subr.mxu0 0.0
    %817 = vmatpush1.msra.mxu0 %v716
    %818 = vmatprep.subr.mxu0 0.0
    %819 = vmatpush1.msra.mxu0 %v717
    %820 = vmatprep.subr.mxu0 0.0
    %821 = vmatpush1.msra.mxu0 %v718
    %822 = vmatprep.mubr.f32.mxu0 %v624
    %823 = vmatmul.mubr.f32.gmra.mrb[0].mxu0 %v623
    %v824 = vpop.f32.mrb[0].mxu0
    %v825 = vadd.f32 %v756, %v824
    %v826 = vpop.f32.mrb[0].mxu0
    %827 = vmatprep.mubr.f32.mxu0 %v628
    %828 = vmatmul.mubr.f32.gmra.mrb[0].mxu0 %v627
    %v829 = vpop.f32.mrb[0].mxu0
    %v830 = vadd.f32 %v756, %v829
    %v831 = vpop.f32.mrb[0].mxu0
    %832 = vmatprep.mubr.f32.mxu0 %v632
    %833 = vmatmul.mubr.f32.gmra.mrb[0].mxu0 %v631
    %v834 = vpop.f32.mrb[0].mxu0
    %v835 = vadd.f32 %v756, %v834
    %v836 = vpop.f32.mrb[0].mxu0
    %837 = vmatprep.mubr.f32.mxu0 %v636
    %838 = vmatmul.mubr.f32.gmra.mrb[0].mxu0 %v635
    %v839 = vpop.f32.mrb[0].mxu0
    %v840 = vadd.f32 %v756, %v839
    %v841 = vpop.f32.mrb[0].mxu0
    %842 = vmatprep.mubr.f32.mxu0 %v640
    %843 = vmatmul.mubr.f32.gmra.mrb[0].mxu0 %v639
    %v844 = vpop.f32.mrb[0].mxu0
    %v845 = vadd.f32 %v756, %v844
    %v846 = vpop.f32.mrb[0].mxu0
    %847 = vmatprep.mubr.f32.mxu0 %v644
    %848 = vmatmul.mubr.f32.gmra.mrb[0].mxu0 %v643
    %v849 = vpop.f32.mrb[0].mxu0
    %v850 = vadd.f32 %v756, %v849
    %v851 = vpop.f32.mrb[0].mxu0
    %852 = vmatprep.mubr.f32.mxu0 %v648
    %853 = vmatmul.mubr.f32.gmra.mrb[0].mxu0 %v647
    %v854 = vpop.f32.mrb[0].mxu0
    %v855 = vadd.f32 %v756, %v854
    %v856 = vpop.f32.mrb[0].mxu0
    %857 = vmatprep.mubr.f32.mxu0 %v652
    %858 = vmatmul.mubr.f32.gmra.mrb[0].mxu0 %v651
    %v859 = vpop.f32.mrb[0].mxu0
    %v860 = vadd.f32 %v756, %v859
    %v861 = vpop.f32.mrb[0].mxu0
    %862 = vmatprep.mubr.f32.mxu0 %v656
    %863 = vmatmul.mubr.f32.gmra.mrb[0].mxu0 %v655
    %v864 = vpop.f32.mrb[0].mxu0
    %v865 = vadd.f32 %v756, %v864
    %v866 = vpop.f32.mrb[0].mxu0
    %867 = vmatprep.mubr.f32.mxu0 %v660
    %868 = vmatmul.mubr.f32.gmra.mrb[0].mxu0 %v659
    %v869 = vpop.f32.mrb[0].mxu0
    %v870 = vadd.f32 %v756, %v869
    %v871 = vpop.f32.mrb[0].mxu0
    %872 = vmatprep.mubr.f32.mxu0 %v664
    %873 = vmatmul.mubr.f32.gmra.mrb[0].mxu0 %v663
    %v874 = vpop.f32.mrb[0].mxu0
    %v875 = vadd.f32 %v756, %v874
    %v876 = vpop.f32.mrb[0].mxu0
    %877 = vmatprep.mubr.f32.mxu0 %v668
    %878 = vmatmul.mubr.f32.gmra.mrb[0].mxu0 %v667
    %v879 = vpop.f32.mrb[0].mxu0
    %v880 = vadd.f32 %v756, %v879
    %v881 = vpop.f32.mrb[0].mxu0
    %882 = vmatprep.mubr.f32.mxu0 %v672
    %883 = vmatmul.mubr.f32.gmra.mrb[0].mxu0 %v671
    %v884 = vpop.f32.mrb[0].mxu0
    %v885 = vadd.f32 %v756, %v884
    %v886 = vpop.f32.mrb[0].mxu0
    %887 = vmatprep.mubr.f32.mxu0 %v676
    %888 = vmatmul.mubr.f32.gmra.mrb[0].mxu0 %v675
    %v889 = vpop.f32.mrb[0].mxu0
    %v890 = vadd.f32 %v756, %v889
    %v891 = vpop.f32.mrb[0].mxu0
    %892 = vmatprep.mubr.f32.mxu0 %v680
    %893 = vmatmul.mubr.f32.gmra.mrb[0].mxu0 %v679
    %v894 = vpop.f32.mrb[0].mxu0
    %v895 = vadd.f32 %v756, %v894
    %v896 = vpop.f32.mrb[0].mxu0
    %897 = vmatprep.mubr.f32.mxu0 %v684
    %898 = vmatmul.mubr.f32.gmra.mrb[0].mxu0 %v683
    %v899 = vpop.f32.mrb[0].mxu0
    %v900 = vadd.f32 %v756, %v899
    %v901 = vpop.f32.mrb[0].mxu0
    %902 = vdwg.mxu0
    %903 = vmatprep.subr.mxu0 0.0
    %904 = vmatpush1.msra.mxu0 %v719
    %905 = vmatprep.subr.mxu0 0.0
    %906 = vmatpush1.msra.mxu0 %v720
    %907 = vmatprep.subr.mxu0 0.0
    %908 = vmatpush1.msra.mxu0 %v721
    %909 = vmatprep.subr.mxu0 0.0
    %910 = vmatpush1.msra.mxu0 %v722
    %911 = vmatprep.subr.mxu0 0.0
    %912 = vmatpush1.msra.mxu0 %v723
    %913 = vmatprep.subr.mxu0 0.0
    %914 = vmatpush1.msra.mxu0 %v724
    %915 = vmatprep.subr.mxu0 0.0
    %916 = vmatpush1.msra.mxu0 %v725
    %917 = vmatprep.subr.mxu0 0.0
    %918 = vmatpush1.msra.mxu0 %v726
    %919 = vmatprep.subr.mxu0 0.0
    %920 = vmatpush1.msra.mxu0 %v727
    %921 = vmatprep.subr.mxu0 0.0
    %922 = vmatpush1.msra.mxu0 %v728
    %923 = vmatprep.subr.mxu0 0.0
    %924 = vmatpush1.msra.mxu0 %v729
    %925 = vmatprep.subr.mxu0 0.0
    %926 = vmatpush1.msra.mxu0 %v730
    %927 = vmatprep.subr.mxu0 0.0
    %928 = vmatpush1.msra.mxu0 %v731
    %929 = vmatprep.subr.mxu0 0.0
    %930 = vmatpush1.msra.mxu0 %v732
    %931 = vmatprep.subr.mxu0 0.0
    %932 = vmatpush1.msra.mxu0 %v733
    %933 = vmatprep.subr.mxu0 0.0
    %934 = vmatpush1.msra.mxu0 %v734
    %935 = vmatprep.subr.mxu0 0.0
    %936 = vmatpush1.msra.mxu0 %v735
    %937 = vmatprep.subr.mxu0 0.0
    %938 = vmatpush1.msra.mxu0 %v736
    %939 = vmatprep.subr.mxu0 0.0
    %940 = vmatpush1.msra.mxu0 %v737
    %941 = vmatprep.subr.mxu0 0.0
    %942 = vmatpush1.msra.mxu0 %v738
    %943 = vmatprep.subr.mxu0 0.0
    %944 = vmatpush1.msra.mxu0 %v739
    %945 = vmatprep.subr.mxu0 0.0
    %946 = vmatpush1.msra.mxu0 %v740
    %947 = vmatprep.subr.mxu0 0.0
    %948 = vmatpush1.msra.mxu0 %v741
    %949 = vmatprep.subr.mxu0 0.0
    %950 = vmatpush1.msra.mxu0 %v742
    %951 = vmatprep.subr.mxu0 0.0
    %952 = vmatpush1.msra.mxu0 %v743
    %953 = vmatprep.subr.mxu0 0.0
    %954 = vmatpush1.msra.mxu0 %v744
    %955 = vmatprep.subr.mxu0 0.0
    %956 = vmatpush1.msra.mxu0 %v745
    %957 = vmatprep.subr.mxu0 0.0
    %958 = vmatpush1.msra.mxu0 %v746
    %959 = vmatprep.subr.mxu0 0.0
    %960 = vmatpush1.msra.mxu0 %v747
    %961 = vmatprep.subr.mxu0 0.0
    %962 = vmatpush1.msra.mxu0 %v748
    %963 = vmatprep.subr.mxu0 0.0
    %964 = vmatpush1.msra.mxu0 %v749
    %965 = vmatprep.subr.mxu0 0.0
    %966 = vmatpush1.msra.mxu0 %v750
    %967 = vmatprep.mubr.f32.mxu0 %v626
    %968 = vmatmul.mubr.f32.gmra.mrb[0].mxu0 %v625
    %v969 = vpop.f32.mrb[0].mxu0
    %v970 = vadd.f32 %v825, %v969
    %v971 = vpop.f32.mrb[0].mxu0
    %972 = vmatprep.mubr.f32.mxu0 %v630
    %973 = vmatmul.mubr.f32.gmra.mrb[0].mxu0 %v629
    %v974 = vpop.f32.mrb[0].mxu0
    %v975 = vadd.f32 %v830, %v974
    %v976 = vpop.f32.mrb[0].mxu0
    %977 = vmatprep.mubr.f32.mxu0 %v634
    %978 = vmatmul.mubr.f32.gmra.mrb[0].mxu0 %v633
    %v979 = vpop.f32.mrb[0].mxu0
    %v980 = vadd.f32 %v835, %v979
    %v981 = vpop.f32.mrb[0].mxu0
    %982 = vmatprep.mubr.f32.mxu0 %v638
    %983 = vmatmul.mubr.f32.gmra.mrb[0].mxu0 %v637
    %v984 = vpop.f32.mrb[0].mxu0
    %v985 = vadd.f32 %v840, %v984
    %v986 = vpop.f32.mrb[0].mxu0
    %987 = vmatprep.mubr.f32.mxu0 %v642
    %988 = vmatmul.mubr.f32.gmra.mrb[0].mxu0 %v641
    %v989 = vpop.f32.mrb[0].mxu0
    %v990 = vadd.f32 %v845, %v989
    %v991 = vpop.f32.mrb[0].mxu0
    %992 = vmatprep.mubr.f32.mxu0 %v646
    %993 = vmatmul.mubr.f32.gmra.mrb[0].mxu0 %v645
    %v994 = vpop.f32.mrb[0].mxu0
    %v995 = vadd.f32 %v850, %v994
    %v996 = vpop.f32.mrb[0].mxu0
    %997 = vmatprep.mubr.f32.mxu0 %v650
    %998 = vmatmul.mubr.f32.gmra.mrb[0].mxu0 %v649
    %v999 = vpop.f32.mrb[0].mxu0
    %v1000 = vadd.f32 %v855, %v999
    %v1001 = vpop.f32.mrb[0].mxu0
    %1002 = vmatprep.mubr.f32.mxu0 %v654
    %1003 = vmatmul.mubr.f32.gmra.mrb[0].mxu0 %v653
    %v1004 = vpop.f32.mrb[0].mxu0
    %v1005 = vadd.f32 %v860, %v1004
    %v1006 = vpop.f32.mrb[0].mxu0
    %1007 = vmatprep.mubr.f32.mxu0 %v658
    %1008 = vmatmul.mubr.f32.gmra.mrb[0].mxu0 %v657
    %v1009 = vpop.f32.mrb[0].mxu0
    %v1010 = vadd.f32 %v865, %v1009
    %v1011 = vpop.f32.mrb[0].mxu0
    %1012 = vmatprep.mubr.f32.mxu0 %v662
    %1013 = vmatmul.mubr.f32.gmra.mrb[0].mxu0 %v661
    %v1014 = vpop.f32.mrb[0].mxu0
    %v1015 = vadd.f32 %v870, %v1014
    %v1016 = vpop.f32.mrb[0].mxu0
    %1017 = vmatprep.mubr.f32.mxu0 %v666
    %1018 = vmatmul.mubr.f32.gmra.mrb[0].mxu0 %v665
    %v1019 = vpop.f32.mrb[0].mxu0
    %v1020 = vadd.f32 %v875, %v1019
    %v1021 = vpop.f32.mrb[0].mxu0
    %1022 = vmatprep.mubr.f32.mxu0 %v670
    %1023 = vmatmul.mubr.f32.gmra.mrb[0].mxu0 %v669
    %v1024 = vpop.f32.mrb[0].mxu0
    %v1025 = vadd.f32 %v880, %v1024
    %v1026 = vpop.f32.mrb[0].mxu0
    %1027 = vmatprep.mubr.f32.mxu0 %v674
    %1028 = vmatmul.mubr.f32.gmra.mrb[0].mxu0 %v673
    %v1029 = vpop.f32.mrb[0].mxu0
    %v1030 = vadd.f32 %v885, %v1029
    %v1031 = vpop.f32.mrb[0].mxu0
    %1032 = vmatprep.mubr.f32.mxu0 %v678
    %1033 = vmatmul.mubr.f32.gmra.mrb[0].mxu0 %v677
    %v1034 = vpop.f32.mrb[0].mxu0
    %v1035 = vadd.f32 %v890, %v1034
    %v1036 = vpop.f32.mrb[0].mxu0
    %1037 = vmatprep.mubr.f32.mxu0 %v682
    %1038 = vmatmul.mubr.f32.gmra.mrb[0].mxu0 %v681
    %v1039 = vpop.f32.mrb[0].mxu0
    %v1040 = vadd.f32 %v895, %v1039
    %v1041 = vpop.f32.mrb[0].mxu0
    %1042 = vmatprep.mubr.f32.mxu0 %v686
    %1043 = vmatmul.mubr.f32.gmra.mrb[0].mxu0 %v685
    %v1044 = vpop.f32.mrb[0].mxu0
    %v1045 = vadd.f32 %v900, %v1044
    %v1046 = vpop.f32.mrb[0].mxu0
    %1047 = vdwg.mxu0
    %v1048 = vmax.f32 %v970, 0.0
    %v1049 = vmax.f32 %v975, 0.0
    %v1050 = vmax.f32 %v980, 0.0
    %v1051 = vmax.f32 %v985, 0.0
    %v1052 = vmax.f32 %v990, 0.0
    %v1053 = vmax.f32 %v995, 0.0
    %v1054 = vmax.f32 %v1000, 0.0
    %v1055 = vmax.f32 %v1005, 0.0
    %v1056 = vmax.f32 %v1010, 0.0
    %v1057 = vmax.f32 %v1015, 0.0
    %v1058 = vmax.f32 %v1020, 0.0
    %v1059 = vmax.f32 %v1025, 0.0
    %v1060 = vmax.f32 %v1030, 0.0
    %v1061 = vmax.f32 %v1035, 0.0
    %v1062 = vmax.f32 %v1040, 0.0
    %v1063 = vmax.f32 %v1045, 0.0
    %v1064 = vld [vmem:[%s5] sm:$0xff]
    %v1065 = vld [vmem:[%s5 + $0x8] sm:$0xff]
    %v1066 = vld [vmem:[%s5 + $0x10] sm:$0xff]
    %v1067 = vld [vmem:[%s5 + $0x18] sm:$0xff]
    %v1068 = vld [vmem:[%s5 + $0x20] sm:$0xff]
    %v1069 = vld [vmem:[%s5 + $0x28] sm:$0xff]
    %v1070 = vld [vmem:[%s5 + $0x30] sm:$0xff]
    %v1071 = vld [vmem:[%s5 + $0x38] sm:$0xff]
    %v1072 = vld [vmem:[%s5 + $0x40] sm:$0xff]
    %v1073 = vld [vmem:[%s5 + $0x48] sm:$0xff]
    %v1074 = vld [vmem:[%s5 + $0x50] sm:$0xff]
    %v1075 = vld [vmem:[%s5 + $0x58] sm:$0xff]
    %v1076 = vld [vmem:[%s5 + $0x60] sm:$0xff]
    %v1077 = vld [vmem:[%s5 + $0x68] sm:$0xff]
    %v1078 = vld [vmem:[%s5 + $0x70] sm:$0xff]
    %v1079 = vld [vmem:[%s5 + $0x78] sm:$0xff]
    %v1080 = vld [vmem:[%s6] sm:$0x1]
    %v1082 = vlaneseq
    %v1083 = vshrl.u32 %v1082, 7
    %v1084 = vsub.s32 0, %v1083
    %v1085 = vrot.slane %v1080, %v1084
    %1087 = vmatprep.subr.mxu0 0.0
    %1088 = vmatpush1.msra.mxu0 %v1064
    %1089 = vmatprep.subr.mxu0 0.0
    %1090 = vmatpush1.msra.mxu0 %v1065
    %1091 = vmatprep.subr.mxu0 0.0
    %1092 = vmatpush1.msra.mxu0 %v1066
    %1093 = vmatprep.subr.mxu0 0.0
    %1094 = vmatpush1.msra.mxu0 %v1067
    %1095 = vmatprep.subr.mxu0 0.0
    %1096 = vmatpush1.msra.mxu0 %v1068
    %1097 = vmatprep.subr.mxu0 0.0
    %1098 = vmatpush1.msra.mxu0 %v1069
    %1099 = vmatprep.subr.mxu0 0.0
    %1100 = vmatpush1.msra.mxu0 %v1070
    %1101 = vmatprep.subr.mxu0 0.0
    %1102 = vmatpush1.msra.mxu0 %v1071
    %1103 = vmatprep.subr.mxu0 0.0
    %1104 = vmatpush1.msra.mxu0 %v1072
    %1105 = vmatprep.subr.mxu0 0.0
    %1106 = vmatpush1.msra.mxu0 %v1073
    %1107 = vmatprep.subr.mxu0 0.0
    %1108 = vmatpush1.msra.mxu0 %v1074
    %1109 = vmatprep.subr.mxu0 0.0
    %1110 = vmatpush1.msra.mxu0 %v1075
    %1111 = vmatprep.subr.mxu0 0.0
    %1112 = vmatpush1.msra.mxu0 %v1076
    %1113 = vmatprep.subr.mxu0 0.0
    %1114 = vmatpush1.msra.mxu0 %v1077
    %1115 = vmatprep.subr.mxu0 0.0
    %1116 = vmatpush1.msra.mxu0 %v1078
    %1117 = vmatprep.subr.mxu0 0.0
    %1118 = vmatpush1.msra.mxu0 %v1079
    %1119 = vmatprep.subr.mxu0 0.0
    %1120 = vmatpush1.msra.mxu0 0.0
    %1121 = vmatprep.subr.mxu0 0.0
    %1122 = vmatpush1.msra.mxu0 0.0
    %1123 = vmatprep.subr.mxu0 0.0
    %1124 = vmatpush1.msra.mxu0 0.0
    %1125 = vmatprep.subr.mxu0 0.0
    %1126 = vmatpush1.msra.mxu0 0.0
    %1127 = vmatprep.subr.mxu0 0.0
    %1128 = vmatpush1.msra.mxu0 0.0
    %1129 = vmatprep.subr.mxu0 0.0
    %1130 = vmatpush1.msra.mxu0 0.0
    %1131 = vmatprep.subr.mxu0 0.0
    %1132 = vmatpush1.msra.mxu0 0.0
    %1133 = vmatprep.subr.mxu0 0.0
    %1134 = vmatpush1.msra.mxu0 0.0
    %1135 = vmatprep.subr.mxu0 0.0
    %1136 = vmatpush1.msra.mxu0 0.0
    %1137 = vmatprep.subr.mxu0 0.0
    %1138 = vmatpush1.msra.mxu0 0.0
    %1139 = vmatprep.subr.mxu0 0.0
    %1140 = vmatpush1.msra.mxu0 0.0
    %1141 = vmatprep.subr.mxu0 0.0
    %1142 = vmatpush1.msra.mxu0 0.0
    %1143 = vmatprep.subr.mxu0 0.0
    %1144 = vmatpush1.msra.mxu0 0.0
    %1145 = vmatprep.subr.mxu0 0.0
    %1146 = vmatpush1.msra.mxu0 0.0
    %1147 = vmatprep.subr.mxu0 0.0
    %1148 = vmatpush1.msra.mxu0 0.0
    %1149 = vmatprep.subr.mxu0 0.0
    %1150 = vmatpush1.msra.mxu0 0.0
    %1151 = vmatprep.mubr.f32.mxu0 0.0
    %1152 = vmatmul.mubr.f32.gmra.mrb[0].mxu0 %v1048
    %v1153 = vpop.f32.mrb[0].mxu0
    %v1154 = vadd.f32 %v1085, %v1153
    %v1155 = vpop.f32.mrb[0].mxu0
    %1156 = vmatprep.mubr.f32.mxu0 0.0
    %1157 = vmatmul.mubr.f32.gmra.mrb[0].mxu0 %v1049
    %v1158 = vpop.f32.mrb[0].mxu0
    %v1159 = vadd.f32 %v1085, %v1158
    %v1160 = vpop.f32.mrb[0].mxu0
    %1161 = vmatprep.mubr.f32.mxu0 0.0
    %1162 = vmatmul.mubr.f32.gmra.mrb[0].mxu0 %v1050
    %v1163 = vpop.f32.mrb[0].mxu0
    %v1164 = vadd.f32 %v1085, %v1163
    %v1165 = vpop.f32.mrb[0].mxu0
    %1166 = vmatprep.mubr.f32.mxu0 0.0
    %1167 = vmatmul.mubr.f32.gmra.mrb[0].mxu0 %v1051
    %v1168 = vpop.f32.mrb[0].mxu0
    %v1169 = vadd.f32 %v1085, %v1168
    %v1170 = vpop.f32.mrb[0].mxu0
    %1171 = vmatprep.mubr.f32.mxu0 0.0
    %1172 = vmatmul.mubr.f32.gmra.mrb[0].mxu0 %v1052
    %v1173 = vpop.f32.mrb[0].mxu0
    %v1174 = vadd.f32 %v1085, %v1173
    %v1175 = vpop.f32.mrb[0].mxu0
    %1176 = vmatprep.mubr.f32.mxu0 0.0
    %1177 = vmatmul.mubr.f32.gmra.mrb[0].mxu0 %v1053
    %v1178 = vpop.f32.mrb[0].mxu0
    %v1179 = vadd.f32 %v1085, %v1178
    %v1180 = vpop.f32.mrb[0].mxu0
    %1181 = vmatprep.mubr.f32.mxu0 0.0
    %1182 = vmatmul.mubr.f32.gmra.mrb[0].mxu0 %v1054
    %v1183 = vpop.f32.mrb[0].mxu0
    %v1184 = vadd.f32 %v1085, %v1183
    %v1185 = vpop.f32.mrb[0].mxu0
    %1186 = vmatprep.mubr.f32.mxu0 0.0
    %1187 = vmatmul.mubr.f32.gmra.mrb[0].mxu0 %v1055
    %v1188 = vpop.f32.mrb[0].mxu0
    %v1189 = vadd.f32 %v1085, %v1188
    %v1190 = vpop.f32.mrb[0].mxu0
    %1191 = vmatprep.mubr.f32.mxu0 0.0
    %1192 = vmatmul.mubr.f32.gmra.mrb[0].mxu0 %v1056
    %v1193 = vpop.f32.mrb[0].mxu0
    %v1194 = vadd.f32 %v1085, %v1193
    %v1195 = vpop.f32.mrb[0].mxu0
    %1196 = vmatprep.mubr.f32.mxu0 0.0
    %1197 = vmatmul.mubr.f32.gmra.mrb[0].mxu0 %v1057
    %v1198 = vpop.f32.mrb[0].mxu0
    %v1199 = vadd.f32 %v1085, %v1198
    %v1200 = vpop.f32.mrb[0].mxu0
    %1201 = vmatprep.mubr.f32.mxu0 0.0
    %1202 = vmatmul.mubr.f32.gmra.mrb[0].mxu0 %v1058
    %v1203 = vpop.f32.mrb[0].mxu0
    %v1204 = vadd.f32 %v1085, %v1203
    %v1205 = vpop.f32.mrb[0].mxu0
    %1206 = vmatprep.mubr.f32.mxu0 0.0
    %1207 = vmatmul.mubr.f32.gmra.mrb[0].mxu0 %v1059
    %v1208 = vpop.f32.mrb[0].mxu0
    %v1209 = vadd.f32 %v1085, %v1208
    %v1210 = vpop.f32.mrb[0].mxu0
    %1211 = vmatprep.mubr.f32.mxu0 0.0
    %1212 = vmatmul.mubr.f32.gmra.mrb[0].mxu0 %v1060
    %v1213 = vpop.f32.mrb[0].mxu0
    %v1214 = vadd.f32 %v1085, %v1213
    %v1215 = vpop.f32.mrb[0].mxu0
    %1216 = vmatprep.mubr.f32.mxu0 0.0
    %1217 = vmatmul.mubr.f32.gmra.mrb[0].mxu0 %v1061
    %v1218 = vpop.f32.mrb[0].mxu0
    %v1219 = vadd.f32 %v1085, %v1218
    %v1220 = vpop.f32.mrb[0].mxu0
    %1221 = vmatprep.mubr.f32.mxu0 0.0
    %1222 = vmatmul.mubr.f32.gmra.mrb[0].mxu0 %v1062
    %v1223 = vpop.f32.mrb[0].mxu0
    %v1224 = vadd.f32 %v1085, %v1223
    %v1225 = vpop.f32.mrb[0].mxu0
    %1226 = vmatprep.mubr.f32.mxu0 0.0
    %1227 = vmatmul.mubr.f32.gmra.mrb[0].mxu0 %v1063
    %v1228 = vpop.f32.mrb[0].mxu0
    %v1229 = vadd.f32 %v1085, %v1228
    %v1230 = vpop.f32.mrb[0].mxu0
    %1231 = vdwg.mxu0
    %v1232 = vmax.f32 %v1154, 0.0
    %v1233 = vmax.f32 %v1159, 0.0
    %v1234 = vmax.f32 %v1164, 0.0
    %v1235 = vmax.f32 %v1169, 0.0
    %v1236 = vmax.f32 %v1174, 0.0
    %v1237 = vmax.f32 %v1179, 0.0
    %v1238 = vmax.f32 %v1184, 0.0
    %v1239 = vmax.f32 %v1189, 0.0
    %v1240 = vmax.f32 %v1194, 0.0
    %v1241 = vmax.f32 %v1199, 0.0
    %v1242 = vmax.f32 %v1204, 0.0
    %v1243 = vmax.f32 %v1209, 0.0
    %v1244 = vmax.f32 %v1214, 0.0
    %v1245 = vmax.f32 %v1219, 0.0
    %v1246 = vmax.f32 %v1224, 0.0
    %v1247 = vmax.f32 %v1229, 0.0
    %v1248 = vld [vmem:[%s7] sm:$0x1]
    %v1249 = vld [vmem:[#allocation2] sm:$0x1]
    %1251 = vset.pattern.permute.xlu0 0
    %1252 = vperm.xlu0 %1251, %v1249
    %v1253 = vpop.permute.xlu0 %1252
    %v1255 = vlaneseq
    %v1256 = vshrl.u32 %v1255, 7
    %v1257 = vsub.s32 0, %v1256
    %v1258 = vrot.slane %v1253, %v1257
    %vm1259 = vcmask 523264
    %v1261 = vsel %vm1259, %v1248, 0
    %v1264 = vsel %vm1259, %v1232, 0
    %v1267 = vsel %vm1259, %v1233, 0
    %v1270 = vsel %vm1259, %v1234, 0
    %v1273 = vsel %vm1259, %v1235, 0
    %v1276 = vsel %vm1259, %v1236, 0
    %v1279 = vsel %vm1259, %v1237, 0
    %v1282 = vsel %vm1259, %v1238, 0
    %v1285 = vsel %vm1259, %v1239, 0
    %v1288 = vsel %vm1259, %v1240, 0
    %v1291 = vsel %vm1259, %v1241, 0
    %v1294 = vsel %vm1259, %v1242, 0
    %v1297 = vsel %vm1259, %v1243, 0
    %v1300 = vsel %vm1259, %v1244, 0
    %v1303 = vsel %vm1259, %v1245, 0
    %v1306 = vsel %vm1259, %v1246, 0
    %v1309 = vsel %vm1259, %v1247, 0
    %1311 = vmatprep.subr.mxu0 0.0
    %1312 = vmatpush1.xpose.msra.mxu0 %v1264
    %1313 = vmatprep.subr.mxu0 0.0
    %1314 = vmatpush1.xpose.msra.mxu0 %v1267
    %1315 = vmatprep.subr.mxu0 0.0
    %1316 = vmatpush1.xpose.msra.mxu0 %v1270
    %1317 = vmatprep.subr.mxu0 0.0
    %1318 = vmatpush1.xpose.msra.mxu0 %v1273
    %1319 = vmatprep.subr.mxu0 0.0
    %1320 = vmatpush1.xpose.msra.mxu0 %v1276
    %1321 = vmatprep.subr.mxu0 0.0
    %1322 = vmatpush1.xpose.msra.mxu0 %v1279
    %1323 = vmatprep.subr.mxu0 0.0
    %1324 = vmatpush1.xpose.msra.mxu0 %v1282
    %1325 = vmatprep.subr.mxu0 0.0
    %1326 = vmatpush1.xpose.msra.mxu0 %v1285
    %1327 = vmatprep.subr.mxu0 0.0
    %1328 = vmatpush1.xpose.msra.mxu0 %v1288
    %1329 = vmatprep.subr.mxu0 0.0
    %1330 = vmatpush1.xpose.msra.mxu0 %v1291
    %1331 = vmatprep.subr.mxu0 0.0
    %1332 = vmatpush1.xpose.msra.mxu0 %v1294
    %1333 = vmatprep.subr.mxu0 0.0
    %1334 = vmatpush1.xpose.msra.mxu0 %v1297
    %1335 = vmatprep.subr.mxu0 0.0
    %1336 = vmatpush1.xpose.msra.mxu0 %v1300
    %1337 = vmatprep.subr.mxu0 0.0
    %1338 = vmatpush1.xpose.msra.mxu0 %v1303
    %1339 = vmatprep.subr.mxu0 0.0
    %1340 = vmatpush1.xpose.msra.mxu0 %v1306
    %1341 = vmatprep.subr.mxu0 0.0
    %1342 = vmatpush1.xpose.msra.mxu0 %v1309
    %1343 = vmatprep.subr.mxu0 0.0
    %1344 = vmatpush1.xpose.msra.mxu0 0.0
    %1345 = vmatprep.subr.mxu0 0.0
    %1346 = vmatpush1.xpose.msra.mxu0 0.0
    %1347 = vmatprep.subr.mxu0 0.0
    %1348 = vmatpush1.xpose.msra.mxu0 0.0
    %1349 = vmatprep.subr.mxu0 0.0
    %1350 = vmatpush1.xpose.msra.mxu0 0.0
    %1351 = vmatprep.subr.mxu0 0.0
    %1352 = vmatpush1.xpose.msra.mxu0 0.0
    %1353 = vmatprep.subr.mxu0 0.0
    %1354 = vmatpush1.xpose.msra.mxu0 0.0
    %1355 = vmatprep.subr.mxu0 0.0
    %1356 = vmatpush1.xpose.msra.mxu0 0.0
    %1357 = vmatprep.subr.mxu0 0.0
    %1358 = vmatpush1.xpose.msra.mxu0 0.0
    %1359 = vmatprep.subr.mxu0 0.0
    %1360 = vmatpush1.xpose.msra.mxu0 0.0
    %1361 = vmatprep.subr.mxu0 0.0
    %1362 = vmatpush1.xpose.msra.mxu0 0.0
    %1363 = vmatprep.subr.mxu0 0.0
    %1364 = vmatpush1.xpose.msra.mxu0 0.0
    %1365 = vmatprep.subr.mxu0 0.0
    %1366 = vmatpush1.xpose.msra.mxu0 0.0
    %1367 = vmatprep.subr.mxu0 0.0
    %1368 = vmatpush1.xpose.msra.mxu0 0.0
    %1369 = vmatprep.subr.mxu0 0.0
    %1370 = vmatpush1.xpose.msra.mxu0 0.0
    %1371 = vmatprep.subr.mxu0 0.0
    %1372 = vmatpush1.xpose.msra.mxu0 0.0
    %1373 = vmatprep.subr.mxu0 0.0
    %1374 = vmatpush1.xpose.msra.mxu0 0.0
    %1375 = vmatprep.mubr.f32.mxu0 0.0
    %1376 = vmatmul.mubr.f32.gmra.mrb[0].mxu0 %v1261
    %v1377 = vpop.f32.mrb[0].mxu0
    %v1378 = vadd.f32 %v1258, %v1377
    %v1379 = vpop.f32.mrb[0].mxu0
    %1380 = vdwg.mxu0
    %v1381 = vxor.u32 %v1378, 2147483648
    %v1382 = vmul.f32 %v1381, 1.442695
    %v1383 = vpow.pop %v1382
    %v1384 = vadd.f32 %v1383, 1.0
    %v1385 = vrcp.pop %v1384
    %v1386 = vmul.f32 1.0, %v1385
    %1387 = vst [vmem:[#allocation6] sm:$0x1] %v1386
    // Predicated region
    $region42: #{tpu_custom_call.1} parent=1 // pred_check
      _
    $region43: #{tpu_custom_call.1} parent=1 // pred_check_branch
      %1389 = sbr.rel (0) target = $region45
    $region44: #{tpu_custom_call.1} parent=1 // pred_region
      %s1391 = ssub.s32 16, 16
      %1392 = vsyncadd [#allocation5], %s1391
      %s1394 = sshll.u32 [#allocation6], 4
      %s1395 = int_to_ptr.vmem [resolvable:$true] %s1394
      %1397 = dma.vmem_to_hbm [thread:$0]  %s1395, 16, %s9, [#allocation5]
    $region45: #{tpu_custom_call.1} parent=1 // pred_fallthru
      _
    // Predicated region
    $region46: #{tpu_custom_call.1} parent=1 // pred_check
      _
    $region47: #{tpu_custom_call.1} parent=1 // pred_check_branch
      %1399 = sbr.rel (0) target = $region49
    $region48: #{tpu_custom_call.1} parent=1 // pred_region
      %1400 = dma.done [#allocation5], 16
    $region49: #{tpu_custom_call.1} parent=1 // pred_fallthru
      _
    %1401 = vsyncpa [#allocation4], 1
    %1402 = vsyncpa [#allocation5], 1

</llo_original>
